<compile_context>
chip_gen: v5e
topology: v5e:2x2
jax: 0.10.0
libtpu: 0.0.40
codegen_flags: <defaults>
</compile_context>

<pallas_src>
import functools

import jax
import jax.numpy as jnp
import numpy as np
from jax.experimental import pallas as pl
from jax.experimental.pallas import tpu as pltpu


def _layernorm_f32(t, g, b, eps=1e-6):
    # The PyTorch module constructs nn.LayerNorm(..., eps=1e-06) explicitly.
    t = t.astype(jnp.float32)
    mu = jnp.mean(t, axis=-1, keepdims=True)
    var = jnp.mean(jnp.square(t - mu), axis=-1, keepdims=True)
    return (t - mu) * jax.lax.rsqrt(var + eps) * g.astype(jnp.float32) + b.astype(jnp.float32)


def cross_attn_kernel(x_ref, ctx_ref, wk_ref, wv_ref, gq_ref, bq_ref,
                      gk_ref, bk_ref, wo_ref, bo_ref, o_ref,
                      k_scr, v_scr, *, heads, dim_head, scale):
    D = heads * dim_head
    cdt = x_ref.dtype  # MXU operand dtype (bf16 in production, f32 in this test)

    # ---- K/V hoist: once per batch element (query-tile index 0) project the
    # context, LayerNorm k, and restack head-major into resident VMEM scratch.
    @pl.when(pl.program_id(1) == 0)
    def _():
        ctx = ctx_ref[0]                                                    # (M, D)
        k_pre = jnp.dot(ctx, wk_ref[...], preferred_element_type=jnp.float32)
        v_pre = jnp.dot(ctx, wv_ref[...], preferred_element_type=jnp.float32)
        k = _layernorm_f32(k_pre, gk_ref[0], bk_ref[0]).astype(cdt)         # (M, D)
        v = v_pre.astype(cdt)                                               # (M, D)
        k_scr[...] = jnp.stack(
            [k[:, h * dim_head:(h + 1) * dim_head] for h in range(heads)], axis=0)
        v_scr[...] = jnp.stack(
            [v[:, h * dim_head:(h + 1) * dim_head] for h in range(heads)], axis=0)

    # ---- query tile: LayerNorm in f32, fold the attention scale into q once.
    q = (_layernorm_f32(x_ref[0], gq_ref[0], bq_ref[0]) * scale).astype(cdt)  # (TQ, D)
    q3 = jnp.stack(
        [q[:, h * dim_head:(h + 1) * dim_head] for h in range(heads)], axis=0)  # (H, TQ, dh)

    k3 = k_scr[...]                                                          # (H, M, dh)
    v3 = v_scr[...]                                                          # (H, M, dh)

    # Single batched contraction over heads; last dims contracted directly
    # (no explicit kh.T transpose), f32 accumulation on the MXU.
    sim = jnp.einsum('hnd,hmd->hnm', q3, k3,
                     preferred_element_type=jnp.float32)                     # (H, TQ, M)

    # Softmax over context tokens, statistics in f32.
    m = jnp.max(sim, axis=-1, keepdims=True)
    p = jnp.exp(sim - m)
    l = jnp.sum(p, axis=-1, keepdims=True)
    attn = p * pl.reciprocal(l, approx=False)  # exact; approx=True offloads to EUP if tol allows
    # TODO(synk): attn_drop / to_out dropout are eval-mode identities; mask=None path only.

    out3 = jnp.einsum('hnm,hmd->hnd', attn.astype(cdt), v3,
                      preferred_element_type=jnp.float32)                    # (H, TQ, dh)

    # '(b h) n d -> b n (h d)': head-major concat back into channels.
    out = jnp.concatenate([out3[h] for h in range(heads)], axis=-1).astype(cdt)  # (TQ, D)

    # to_out Linear(D, D) + bias; one full-width, lane-dense store.
    y = jnp.dot(out, wo_ref[...], preferred_element_type=jnp.float32)
    y = y + bo_ref[0].astype(jnp.float32)
    o_ref[0] = y.astype(o_ref.dtype)


def cross_attention(x, context, params, *, heads, dim_head, q_tile=None):
    B, N, D = x.shape
    Bc, M, Dc = context.shape
    assert D == heads * dim_head and Dc == D and Bc == B
    scale = dim_head ** (-0.5)

    if q_tile is None:
        q_tile = N if N <= 128 else 128
    assert N % q_tile == 0 and (q_tile % 8 == 0 or q_tile == N)
    n_q_tiles = N // q_tile

    gq = params["gq"].reshape(1, D)
    bq = params["bq"].reshape(1, D)
    gk = params["gk"].reshape(1, D)
    bk = params["bk"].reshape(1, D)
    bo = params["bo"].reshape(1, D)
    wkv = params["wkv"]                      # (D, 2D), Linear(D, 2D, bias=False)
    wk, wv = wkv[:, :D], wkv[:, D:]          # split once host-side -> lane-dense in-kernel dots
    wo = params["wo"]                        # (D, D)

    kernel = functools.partial(cross_attn_kernel, heads=heads,
                               dim_head=dim_head, scale=scale)

    return pl.pallas_call(
        kernel,
        out_shape=jax.ShapeDtypeStruct((B, N, D), x.dtype),
        grid_spec=pltpu.PrefetchScalarGridSpec(
            num_scalar_prefetch=0,
            grid=(B, n_q_tiles),
            in_specs=[
                pl.BlockSpec((1, q_tile, D), lambda b, n: (b, n, 0)),  # x (query tile)
                pl.BlockSpec((1, M, D), lambda b, n: (b, 0, 0)),       # context
                pl.BlockSpec((D, D), lambda b, n: (0, 0)),             # W_k
                pl.BlockSpec((D, D), lambda b, n: (0, 0)),             # W_v
                pl.BlockSpec((1, D), lambda b, n: (0, 0)),             # gamma_q
                pl.BlockSpec((1, D), lambda b, n: (0, 0)),             # beta_q
                pl.BlockSpec((1, D), lambda b, n: (0, 0)),             # gamma_k
                pl.BlockSpec((1, D), lambda b, n: (0, 0)),             # beta_k
                pl.BlockSpec((D, D), lambda b, n: (0, 0)),             # W_out
                pl.BlockSpec((1, D), lambda b, n: (0, 0)),             # b_out
            ],
            out_specs=pl.BlockSpec((1, q_tile, D), lambda b, n: (b, n, 0)),
            scratch_shapes=[
                pltpu.VMEM((heads, M, dim_head), x.dtype),  # K, resident per batch
                pltpu.VMEM((heads, M, dim_head), x.dtype),  # V, resident per batch
            ],
        ),
        compiler_params=pltpu.CompilerParams(
            dimension_semantics=("parallel", "arbitrary")),
    )(x, context, wk, wv, gq, bq, gk, bk, wo, bo)


def reference(x, ctx, params, *, heads, dim_head):
    """Pure-JAX reference mirroring the PyTorch forward (eval mode, mask=None)."""
    D = heads * dim_head
    B, N, _ = x.shape
    q = _layernorm_f32(x, params["gq"], params["bq"])
    proj = ctx @ params["wkv"]
    k = _layernorm_f32(proj[..., :D], params["gk"], params["bk"])
    v = proj[..., D:]

    def split_heads(t):
        return t.reshape(B, -1, heads, dim_head).transpose(0, 2, 1, 3)

    qh, kh, vh = map(split_heads, (q, k, v))
    sim = jnp.einsum("bhid,bhjd->bhij", qh, kh) * dim_head ** (-0.5)
    attn = jax.nn.softmax(sim, axis=-1)
    out = jnp.einsum("bhij,bhjd->bhid", attn, vh)
    out = out.transpose(0, 2, 1, 3).reshape(B, N, D)
    return out @ params["wo"] + params["bo"]


if __name__ == "__main__":
    B, heads, dim_head = 2, 4, 8
    D = heads * dim_head          # query_dim == context_dim == 32
    N, M = 16, 16                 # query tokens, context tokens
    TQ = 8                        # query tile -> grid (B, N // TQ) = (2, 2)

    key = jax.random.PRNGKey(0)
    ks = jax.random.split(key, 8)
    x = jax.random.normal(ks[0], (B, N, D), jnp.float32)
    context = jax.random.normal(ks[1], (B, M, D), jnp.float32)

    params = {
        # LayerNorm params (perturbed so gamma/beta actually matter in the check).
        "gq": jnp.ones((D,), jnp.float32) + 0.1 * jax.random.normal(ks[2], (D,)),
        "bq": 0.05 * jax.random.normal(ks[3], (D,), jnp.float32),
        "gk": jnp.ones((D,), jnp.float32) + 0.1 * jax.random.normal(ks[4], (D,)),
        "bk": 0.05 * jax.random.normal(ks[5], (D,), jnp.float32),
        # Linear(D, 2D, bias=False), stored as (in, out)
        "wkv": jax.random.normal(ks[6], (D, 2 * D), jnp.float32) * (D ** -0.5),
        # to_out Linear(D, D) + bias, stored as (in, out)
        "wo": jax.random.normal(ks[7], (D, D), jnp.float32) * (D ** -0.5),
        "bo": jnp.zeros((D,), jnp.float32),
    }

    out = cross_attention(x, context, params, heads=heads, dim_head=dim_head,
                          q_tile=TQ)
    out = jax.block_until_ready(out)

    ref = reference(x, context, params, heads=heads, dim_head=dim_head)
    np.testing.assert_allclose(np.asarray(out), np.asarray(ref),
                               rtol=2e-5, atol=2e-5)
    print("KERNEL_OK")
</pallas_src>

<mosaic_0001>
module attributes {stable_mosaic.version = 11 : i64} {
  func.func @cross_attn_kernel(%arg0: i32, %arg1: i32, %arg2: memref<1x8x32xf32, #tpu.memory_space<vmem>>, %arg3: memref<1x16x32xf32, #tpu.memory_space<vmem>>, %arg4: memref<32x32xf32, #tpu.memory_space<vmem>>, %arg5: memref<32x32xf32, #tpu.memory_space<vmem>>, %arg6: memref<1x32xf32, #tpu.memory_space<vmem>>, %arg7: memref<1x32xf32, #tpu.memory_space<vmem>>, %arg8: memref<1x32xf32, #tpu.memory_space<vmem>>, %arg9: memref<1x32xf32, #tpu.memory_space<vmem>>, %arg10: memref<32x32xf32, #tpu.memory_space<vmem>>, %arg11: memref<1x32xf32, #tpu.memory_space<vmem>>, %arg12: memref<1x8x32xf32, #tpu.memory_space<vmem>>, %arg13: memref<4x16x8xf32, #tpu.memory_space<vmem>>, %arg14: memref<4x16x8xf32, #tpu.memory_space<vmem>>) attributes {dimension_semantics = [#tpu.dimension_semantics<parallel>, #tpu.dimension_semantics<arbitrary>], iteration_bounds = array<i64: 2, 2>, scalar_prefetch = 0 : i64, scratch_operands = 2 : i64, tpu.core_type = #tpu.core_type<tc>, window_params = [{transform_indices = @transform_0, window_bounds = array<i64: 1, 8, 32>}, {transform_indices = @transform_1, window_bounds = array<i64: 1, 16, 32>}, {pipeline_mode = #tpu.pipeline_mode<synchronous>, transform_indices = @transform_2, window_bounds = array<i64: 32, 32>}, {pipeline_mode = #tpu.pipeline_mode<synchronous>, transform_indices = @transform_3, window_bounds = array<i64: 32, 32>}, {pipeline_mode = #tpu.pipeline_mode<synchronous>, transform_indices = @transform_4, window_bounds = array<i64: 1, 32>}, {pipeline_mode = #tpu.pipeline_mode<synchronous>, transform_indices = @transform_5, window_bounds = array<i64: 1, 32>}, {pipeline_mode = #tpu.pipeline_mode<synchronous>, transform_indices = @transform_6, window_bounds = array<i64: 1, 32>}, {pipeline_mode = #tpu.pipeline_mode<synchronous>, transform_indices = @transform_7, window_bounds = array<i64: 1, 32>}, {pipeline_mode = #tpu.pipeline_mode<synchronous>, transform_indices = @transform_8, window_bounds = array<i64: 32, 32>}, {pipeline_mode = #tpu.pipeline_mode<synchronous>, transform_indices = @transform_9, window_bounds = array<i64: 1, 32>}, {transform_indices = @transform_10, window_bounds = array<i64: 1, 8, 32>}]} {
    %c0_i32 = arith.constant 0 : i32
    %0 = arith.cmpi eq, %arg1, %c0_i32 : i32
    %1 = arith.extui %0 : i1 to i32
    %c0_i32_0 = arith.constant 0 : i32
    %2 = arith.cmpi ne, %1, %c0_i32_0 : i32
    scf.if %2 {
      %c0_30 = arith.constant 0 : index
      %c0_31 = arith.constant 0 : index
      %c0_32 = arith.constant 0 : index
      %77 = vector.load %arg3[%c0_30, %c0_31, %c0_32] : memref<1x16x32xf32, #tpu.memory_space<vmem>>, vector<1x16x32xf32>
      %78 = vector.shape_cast %77 : vector<1x16x32xf32> to vector<16x32xf32>
      %c0_33 = arith.constant 0 : index
      %c0_34 = arith.constant 0 : index
      %79 = vector.load %arg4[%c0_33, %c0_34] : memref<32x32xf32, #tpu.memory_space<vmem>>, vector<32x32xf32>
      %cst_35 = arith.constant dense<0.000000e+00> : vector<16x32xf32>
      %80 = tpu.matmul %78, %79, %cst_35 {dimension_numbers = #tpu.dot_dimension_numbers<[1], [0], [0], [1], [0, 0, 1, 1], [], []>} : vector<16x32xf32>, vector<32x32xf32>, vector<16x32xf32> -> vector<16x32xf32>
      %c0_36 = arith.constant 0 : index
      %c0_37 = arith.constant 0 : index
      %81 = vector.load %arg5[%c0_36, %c0_37] : memref<32x32xf32, #tpu.memory_space<vmem>>, vector<32x32xf32>
      %cst_38 = arith.constant dense<0.000000e+00> : vector<16x32xf32>
      %82 = tpu.matmul %78, %81, %cst_38 {dimension_numbers = #tpu.dot_dimension_numbers<[1], [0], [0], [1], [0, 0, 1, 1], [], []>} : vector<16x32xf32>, vector<32x32xf32>, vector<16x32xf32> -> vector<16x32xf32>
      %c0_39 = arith.constant 0 : index
      %c0_40 = arith.constant 0 : index
      %83 = vector.load %arg8[%c0_39, %c0_40] : memref<1x32xf32, #tpu.memory_space<vmem>>, vector<1x32xf32>
      %84 = vector.shape_cast %83 : vector<1x32xf32> to vector<32xf32>
      %c0_41 = arith.constant 0 : index
      %c0_42 = arith.constant 0 : index
      %85 = vector.load %arg9[%c0_41, %c0_42] : memref<1x32xf32, #tpu.memory_space<vmem>>, vector<1x32xf32>
      %86 = vector.shape_cast %85 : vector<1x32xf32> to vector<32xf32>
      %cst_43 = arith.constant dense<0.000000e+00> : vector<16xf32>
      %87 = vector.multi_reduction <add>, %80, %cst_43 [1] : vector<16x32xf32> to vector<16xf32>
      %88 = vector.shape_cast %87 : vector<16xf32> to vector<16x1xf32>
      %cst_44 = arith.constant 3.200000e+01 : f32
      %89 = vector.broadcast %cst_44 : f32 to vector<16x1xf32>
      %90 = arith.divf %88, %89 : vector<16x1xf32>
      %91 = vector.broadcast %90 : vector<16x1xf32> to vector<16x32xf32>
      %92 = arith.subf %80, %91 : vector<16x32xf32>
      %93 = arith.mulf %92, %92 : vector<16x32xf32>
      %cst_45 = arith.constant dense<0.000000e+00> : vector<16xf32>
      %94 = vector.multi_reduction <add>, %93, %cst_45 [1] : vector<16x32xf32> to vector<16xf32>
      %95 = vector.shape_cast %94 : vector<16xf32> to vector<16x1xf32>
      %cst_46 = arith.constant 3.200000e+01 : f32
      %96 = vector.broadcast %cst_46 : f32 to vector<16x1xf32>
      %97 = arith.divf %95, %96 : vector<16x1xf32>
      %98 = vector.broadcast %90 : vector<16x1xf32> to vector<16x32xf32>
      %99 = arith.subf %80, %98 : vector<16x32xf32>
      %cst_47 = arith.constant 9.99999997E-7 : f32
      %100 = vector.broadcast %cst_47 : f32 to vector<16x1xf32>
      %101 = arith.addf %97, %100 : vector<16x1xf32>
      %102 = math.rsqrt %101 : vector<16x1xf32>
      %103 = vector.broadcast %102 : vector<16x1xf32> to vector<16x32xf32>
      %104 = arith.mulf %99, %103 : vector<16x32xf32>
      %105 = vector.shape_cast %84 : vector<32xf32> to vector<1x32xf32>
      %106 = vector.broadcast %105 : vector<1x32xf32> to vector<16x32xf32>
      %107 = arith.mulf %104, %106 : vector<16x32xf32>
      %108 = vector.shape_cast %86 : vector<32xf32> to vector<1x32xf32>
      %109 = vector.broadcast %108 : vector<1x32xf32> to vector<16x32xf32>
      %110 = arith.addf %107, %109 : vector<16x32xf32>
      %111 = vector.extract_strided_slice %110 {offsets = [0, 0], sizes = [16, 8], strides = [1, 1]} : vector<16x32xf32> to vector<16x8xf32>
      %112 = vector.extract_strided_slice %110 {offsets = [0, 8], sizes = [16, 8], strides = [1, 1]} : vector<16x32xf32> to vector<16x8xf32>
      %113 = vector.extract_strided_slice %110 {offsets = [0, 16], sizes = [16, 8], strides = [1, 1]} : vector<16x32xf32> to vector<16x8xf32>
      %114 = vector.extract_strided_slice %110 {offsets = [0, 24], sizes = [16, 8], strides = [1, 1]} : vector<16x32xf32> to vector<16x8xf32>
      %115 = vector.shape_cast %111 : vector<16x8xf32> to vector<1x16x8xf32>
      %116 = vector.shape_cast %112 : vector<16x8xf32> to vector<1x16x8xf32>
      %117 = vector.shape_cast %113 : vector<16x8xf32> to vector<1x16x8xf32>
      %118 = vector.shape_cast %114 : vector<16x8xf32> to vector<1x16x8xf32>
      %119 = tpu.concatenate %115, %116, %117, %118 in 0 : vector<1x16x8xf32>, vector<1x16x8xf32>, vector<1x16x8xf32>, vector<1x16x8xf32> -> vector<4x16x8xf32>
      %c0_48 = arith.constant 0 : index
      %c0_49 = arith.constant 0 : index
      %c0_50 = arith.constant 0 : index
      %120 = vector.load %arg13[%c0_48, %c0_49, %c0_50] : memref<4x16x8xf32, #tpu.memory_space<vmem>>, vector<4x16x8xf32>
      tpu.vector_store %arg13[%c0_48, %c0_49, %c0_50], %119 {strides = array<i32>} : memref<4x16x8xf32, #tpu.memory_space<vmem>>, vector<4x16x8xf32>,
      %121 = vector.extract_strided_slice %82 {offsets = [0, 0], sizes = [16, 8], strides = [1, 1]} : vector<16x32xf32> to vector<16x8xf32>
      %122 = vector.extract_strided_slice %82 {offsets = [0, 8], sizes = [16, 8], strides = [1, 1]} : vector<16x32xf32> to vector<16x8xf32>
      %123 = vector.extract_strided_slice %82 {offsets = [0, 16], sizes = [16, 8], strides = [1, 1]} : vector<16x32xf32> to vector<16x8xf32>
      %124 = vector.extract_strided_slice %82 {offsets = [0, 24], sizes = [16, 8], strides = [1, 1]} : vector<16x32xf32> to vector<16x8xf32>
      %125 = vector.shape_cast %121 : vector<16x8xf32> to vector<1x16x8xf32>
      %126 = vector.shape_cast %122 : vector<16x8xf32> to vector<1x16x8xf32>
      %127 = vector.shape_cast %123 : vector<16x8xf32> to vector<1x16x8xf32>
      %128 = vector.shape_cast %124 : vector<16x8xf32> to vector<1x16x8xf32>
      %129 = tpu.concatenate %125, %126, %127, %128 in 0 : vector<1x16x8xf32>, vector<1x16x8xf32>, vector<1x16x8xf32>, vector<1x16x8xf32> -> vector<4x16x8xf32>
      %c0_51 = arith.constant 0 : index
      %c0_52 = arith.constant 0 : index
      %c0_53 = arith.constant 0 : index
      %130 = vector.load %arg14[%c0_51, %c0_52, %c0_53] : memref<4x16x8xf32, #tpu.memory_space<vmem>>, vector<4x16x8xf32>
      tpu.vector_store %arg14[%c0_51, %c0_52, %c0_53], %129 {strides = array<i32>} : memref<4x16x8xf32, #tpu.memory_space<vmem>>, vector<4x16x8xf32>,
    } else {
    }
    %c0 = arith.constant 0 : index
    %c0_1 = arith.constant 0 : index
    %c0_2 = arith.constant 0 : index
    %3 = vector.load %arg2[%c0, %c0_1, %c0_2] : memref<1x8x32xf32, #tpu.memory_space<vmem>>, vector<1x8x32xf32>
    %4 = vector.shape_cast %3 : vector<1x8x32xf32> to vector<8x32xf32>
    %c0_3 = arith.constant 0 : index
    %c0_4 = arith.constant 0 : index
    %5 = vector.load %arg6[%c0_3, %c0_4] : memref<1x32xf32, #tpu.memory_space<vmem>>, vector<1x32xf32>
    %6 = vector.shape_cast %5 : vector<1x32xf32> to vector<32xf32>
    %c0_5 = arith.constant 0 : index
    %c0_6 = arith.constant 0 : index
    %7 = vector.load %arg7[%c0_5, %c0_6] : memref<1x32xf32, #tpu.memory_space<vmem>>, vector<1x32xf32>
    %8 = vector.shape_cast %7 : vector<1x32xf32> to vector<32xf32>
    %cst = arith.constant dense<0.000000e+00> : vector<8xf32>
    %9 = vector.multi_reduction <add>, %4, %cst [1] : vector<8x32xf32> to vector<8xf32>
    %10 = vector.shape_cast %9 : vector<8xf32> to vector<8x1xf32>
    %cst_7 = arith.constant 3.200000e+01 : f32
    %11 = vector.broadcast %cst_7 : f32 to vector<8x1xf32>
    %12 = arith.divf %10, %11 : vector<8x1xf32>
    %13 = vector.broadcast %12 : vector<8x1xf32> to vector<8x32xf32>
    %14 = arith.subf %4, %13 : vector<8x32xf32>
    %15 = arith.mulf %14, %14 : vector<8x32xf32>
    %cst_8 = arith.constant dense<0.000000e+00> : vector<8xf32>
    %16 = vector.multi_reduction <add>, %15, %cst_8 [1] : vector<8x32xf32> to vector<8xf32>
    %17 = vector.shape_cast %16 : vector<8xf32> to vector<8x1xf32>
    %cst_9 = arith.constant 3.200000e+01 : f32
    %18 = vector.broadcast %cst_9 : f32 to vector<8x1xf32>
    %19 = arith.divf %17, %18 : vector<8x1xf32>
    %20 = vector.broadcast %12 : vector<8x1xf32> to vector<8x32xf32>
    %21 = arith.subf %4, %20 : vector<8x32xf32>
    %cst_10 = arith.constant 9.99999997E-7 : f32
    %22 = vector.broadcast %cst_10 : f32 to vector<8x1xf32>
    %23 = arith.addf %19, %22 : vector<8x1xf32>
    %24 = math.rsqrt %23 : vector<8x1xf32>
    %25 = vector.broadcast %24 : vector<8x1xf32> to vector<8x32xf32>
    %26 = arith.mulf %21, %25 : vector<8x32xf32>
    %27 = vector.shape_cast %6 : vector<32xf32> to vector<1x32xf32>
    %28 = vector.broadcast %27 : vector<1x32xf32> to vector<8x32xf32>
    %29 = arith.mulf %26, %28 : vector<8x32xf32>
    %30 = vector.shape_cast %8 : vector<32xf32> to vector<1x32xf32>
    %31 = vector.broadcast %30 : vector<1x32xf32> to vector<8x32xf32>
    %32 = arith.addf %29, %31 : vector<8x32xf32>
    %cst_11 = arith.constant 0.353553385 : f32
    %33 = vector.broadcast %cst_11 : f32 to vector<8x32xf32>
    %34 = arith.mulf %32, %33 : vector<8x32xf32>
    %35 = vector.extract_strided_slice %34 {offsets = [0, 0], sizes = [8, 8], strides = [1, 1]} : vector<8x32xf32> to vector<8x8xf32>
    %36 = vector.extract_strided_slice %34 {offsets = [0, 8], sizes = [8, 8], strides = [1, 1]} : vector<8x32xf32> to vector<8x8xf32>
    %37 = vector.extract_strided_slice %34 {offsets = [0, 16], sizes = [8, 8], strides = [1, 1]} : vector<8x32xf32> to vector<8x8xf32>
    %38 = vector.extract_strided_slice %34 {offsets = [0, 24], sizes = [8, 8], strides = [1, 1]} : vector<8x32xf32> to vector<8x8xf32>
    %39 = vector.shape_cast %35 : vector<8x8xf32> to vector<1x8x8xf32>
    %40 = vector.shape_cast %36 : vector<8x8xf32> to vector<1x8x8xf32>
    %41 = vector.shape_cast %37 : vector<8x8xf32> to vector<1x8x8xf32>
    %42 = vector.shape_cast %38 : vector<8x8xf32> to vector<1x8x8xf32>
    %43 = tpu.concatenate %39, %40, %41, %42 in 0 : vector<1x8x8xf32>, vector<1x8x8xf32>, vector<1x8x8xf32>, vector<1x8x8xf32> -> vector<4x8x8xf32>
    %c0_12 = arith.constant 0 : index
    %c0_13 = arith.constant 0 : index
    %c0_14 = arith.constant 0 : index
    %44 = vector.load %arg13[%c0_12, %c0_13, %c0_14] : memref<4x16x8xf32, #tpu.memory_space<vmem>>, vector<4x16x8xf32>
    %c0_15 = arith.constant 0 : index
    %c0_16 = arith.constant 0 : index
    %c0_17 = arith.constant 0 : index
    %45 = vector.load %arg14[%c0_15, %c0_16, %c0_17] : memref<4x16x8xf32, #tpu.memory_space<vmem>>, vector<4x16x8xf32>
    "tpu.trace_start"() <{level = 10 : i32, message = "hnd,hmd->hnm"}> : () -> ()
    %cst_18 = arith.constant dense<0.000000e+00> : vector<4x8x16xf32>
    %46 = tpu.matmul %43, %44, %cst_18 {dimension_numbers = #tpu.dot_dimension_numbers<[2], [2], [1], [1], [0, 0, 0, 1, 1, 1], [0], [0]>} : vector<4x8x8xf32>, vector<4x16x8xf32>, vector<4x8x16xf32> -> vector<4x8x16xf32>
    "tpu.trace_stop"() : () -> ()
    %cst_19 = arith.constant dense<0xFF800000> : vector<4x8xf32>
    %47 = vector.multi_reduction <maximumf>, %46, %cst_19 [2] : vector<4x8x16xf32> to vector<4x8xf32>
    %48 = vector.shape_cast %47 : vector<4x8xf32> to vector<4x8x1xf32>
    %49 = vector.broadcast %48 : vector<4x8x1xf32> to vector<4x8x16xf32>
    %50 = arith.subf %46, %49 : vector<4x8x16xf32>
    %51 = math.exp %50 : vector<4x8x16xf32>
    %cst_20 = arith.constant dense<0.000000e+00> : vector<4x8xf32>
    %52 = vector.multi_reduction <add>, %51, %cst_20 [2] : vector<4x8x16xf32> to vector<4x8xf32>
    %53 = vector.shape_cast %52 : vector<4x8xf32> to vector<4x8x1xf32>
    %54 = tpu.reciprocal %53 : vector<4x8x1xf32> -> vector<4x8x1xf32>
    %55 = vector.broadcast %54 : vector<4x8x1xf32> to vector<4x8x16xf32>
    %56 = arith.mulf %51, %55 : vector<4x8x16xf32>
    "tpu.trace_start"() <{level = 10 : i32, message = "hnm,hmd->hnd"}> : () -> ()
    %cst_21 = arith.constant dense<0.000000e+00> : vector<4x8x8xf32>
    %57 = tpu.matmul %56, %45, %cst_21 {dimension_numbers = #tpu.dot_dimension_numbers<[2], [1], [1], [2], [0, 0, 0, 1, 1, 2], [0], [0]>} : vector<4x8x16xf32>, vector<4x16x8xf32>, vector<4x8x8xf32> -> vector<4x8x8xf32>
    "tpu.trace_stop"() : () -> ()
    %58 = vector.extract_strided_slice %57 {offsets = [0, 0, 0], sizes = [1, 8, 8], strides = [1, 1, 1]} : vector<4x8x8xf32> to vector<1x8x8xf32>
    %59 = vector.shape_cast %58 : vector<1x8x8xf32> to vector<8x8xf32>
    %60 = vector.extract_strided_slice %57 {offsets = [1, 0, 0], sizes = [1, 8, 8], strides = [1, 1, 1]} : vector<4x8x8xf32> to vector<1x8x8xf32>
    %61 = vector.shape_cast %60 : vector<1x8x8xf32> to vector<8x8xf32>
    %62 = vector.extract_strided_slice %57 {offsets = [2, 0, 0], sizes = [1, 8, 8], strides = [1, 1, 1]} : vector<4x8x8xf32> to vector<1x8x8xf32>
    %63 = vector.shape_cast %62 : vector<1x8x8xf32> to vector<8x8xf32>
    %64 = vector.extract_strided_slice %57 {offsets = [3, 0, 0], sizes = [1, 8, 8], strides = [1, 1, 1]} : vector<4x8x8xf32> to vector<1x8x8xf32>
    %65 = vector.shape_cast %64 : vector<1x8x8xf32> to vector<8x8xf32>
    %66 = tpu.concatenate %59, %61, %63, %65 in 1 : vector<8x8xf32>, vector<8x8xf32>, vector<8x8xf32>, vector<8x8xf32> -> vector<8x32xf32>
    %c0_22 = arith.constant 0 : index
    %c0_23 = arith.constant 0 : index
    %67 = vector.load %arg10[%c0_22, %c0_23] : memref<32x32xf32, #tpu.memory_space<vmem>>, vector<32x32xf32>
    %cst_24 = arith.constant dense<0.000000e+00> : vector<8x32xf32>
    %68 = tpu.matmul %66, %67, %cst_24 {dimension_numbers = #tpu.dot_dimension_numbers<[1], [0], [0], [1], [0, 0, 1, 1], [], []>} : vector<8x32xf32>, vector<32x32xf32>, vector<8x32xf32> -> vector<8x32xf32>
    %c0_25 = arith.constant 0 : index
    %c0_26 = arith.constant 0 : index
    %69 = vector.load %arg11[%c0_25, %c0_26] : memref<1x32xf32, #tpu.memory_space<vmem>>, vector<1x32xf32>
    %70 = vector.shape_cast %69 : vector<1x32xf32> to vector<32xf32>
    %71 = vector.shape_cast %70 : vector<32xf32> to vector<1x32xf32>
    %72 = vector.broadcast %71 : vector<1x32xf32> to vector<8x32xf32>
    %73 = arith.addf %68, %72 : vector<8x32xf32>
    %c0_27 = arith.constant 0 : index
    %c0_28 = arith.constant 0 : index
    %c0_29 = arith.constant 0 : index
    %74 = vector.load %arg12[%c0_27, %c0_28, %c0_29] : memref<1x8x32xf32, #tpu.memory_space<vmem>>, vector<1x8x32xf32>
    %75 = vector.shape_cast %74 : vector<1x8x32xf32> to vector<8x32xf32>
    %76 = vector.shape_cast %73 : vector<8x32xf32> to vector<1x8x32xf32>
    tpu.vector_store %arg12[%c0_27, %c0_28, %c0_29], %76 {strides = array<i32>} : memref<1x8x32xf32, #tpu.memory_space<vmem>>, vector<1x8x32xf32>,
    return
  }
  func.func @transform_0(%arg0: i32, %arg1: i32) -> (i32, i32, i32) {
    %c0_i32 = arith.constant 0 : i32
    %c0_i32_0 = arith.constant 0 : i32
    return %arg0, %arg1, %c0_i32 : i32, i32, i32
  }
  func.func @transform_1(%arg0: i32, %arg1: i32) -> (i32, i32, i32) {
    %c0_i32 = arith.constant 0 : i32
    %c0_i32_0 = arith.constant 0 : i32
    %c0_i32_1 = arith.constant 0 : i32
    return %arg0, %c0_i32, %c0_i32_0 : i32, i32, i32
  }
  func.func @transform_2(%arg0: i32, %arg1: i32) -> (i32, i32) {
    %c0_i32 = arith.constant 0 : i32
    %c0_i32_0 = arith.constant 0 : i32
    %c0_i32_1 = arith.constant 0 : i32
    return %c0_i32, %c0_i32_0 : i32, i32
  }
  func.func @transform_3(%arg0: i32, %arg1: i32) -> (i32, i32) {
    %c0_i32 = arith.constant 0 : i32
    %c0_i32_0 = arith.constant 0 : i32
    %c0_i32_1 = arith.constant 0 : i32
    return %c0_i32, %c0_i32_0 : i32, i32
  }
  func.func @transform_4(%arg0: i32, %arg1: i32) -> (i32, i32) {
    %c0_i32 = arith.constant 0 : i32
    %c0_i32_0 = arith.constant 0 : i32
    %c0_i32_1 = arith.constant 0 : i32
    return %c0_i32, %c0_i32_0 : i32, i32
  }
  func.func @transform_5(%arg0: i32, %arg1: i32) -> (i32, i32) {
    %c0_i32 = arith.constant 0 : i32
    %c0_i32_0 = arith.constant 0 : i32
    %c0_i32_1 = arith.constant 0 : i32
    return %c0_i32, %c0_i32_0 : i32, i32
  }
  func.func @transform_6(%arg0: i32, %arg1: i32) -> (i32, i32) {
    %c0_i32 = arith.constant 0 : i32
    %c0_i32_0 = arith.constant 0 : i32
    %c0_i32_1 = arith.constant 0 : i32
    return %c0_i32, %c0_i32_0 : i32, i32
  }
  func.func @transform_7(%arg0: i32, %arg1: i32) -> (i32, i32) {
    %c0_i32 = arith.constant 0 : i32
    %c0_i32_0 = arith.constant 0 : i32
    %c0_i32_1 = arith.constant 0 : i32
    return %c0_i32, %c0_i32_0 : i32, i32
  }
  func.func @transform_8(%arg0: i32, %arg1: i32) -> (i32, i32) {
    %c0_i32 = arith.constant 0 : i32
    %c0_i32_0 = arith.constant 0 : i32
    %c0_i32_1 = arith.constant 0 : i32
    return %c0_i32, %c0_i32_0 : i32, i32
  }
  func.func @transform_9(%arg0: i32, %arg1: i32) -> (i32, i32) {
    %c0_i32 = arith.constant 0 : i32
    %c0_i32_0 = arith.constant 0 : i32
    %c0_i32_1 = arith.constant 0 : i32
    return %c0_i32, %c0_i32_0 : i32, i32
  }
  func.func @transform_10(%arg0: i32, %arg1: i32) -> (i32, i32, i32) {
    %c0_i32 = arith.constant 0 : i32
    %c0_i32_0 = arith.constant 0 : i32
    return %arg0, %arg1, %c0_i32 : i32, i32, i32
  }
}

</mosaic_0001>

<llo_original>
// kernel: tpu_custom_call.1
$region0: #{tpu_custom_call.1}
  #allocation0 [shape = 'u32[]', space=smem, size = 0x4, offset = 0x4, fixed_abs, tag = 'smem constant byte address 0x4 - core index']
  #allocation1 [shape = 'u32[72,128]{1,0:T(1,128)}', space=vmem, size = 0x9000, scoped, tag = 'internal scratch']
  #allocation2 [shape = 'f32[4,16,8]{2,1,0:T(8,128)}', space=vmem, size = 0x8000, scoped, tag = 'scratch operand']
  #allocation3 [shape = 'f32[4,16,8]{2,1,0:T(8,128)}', space=vmem, size = 0x8000, scoped, tag = 'scratch operand']
  %s0 = inlined_call_operand.hbm [shape: f32[2,16,32], index: 0, kind: input, shape index: {}]
  %s1 = inlined_call_operand.hbm [shape: f32[2,16,32], index: 1, kind: input, shape index: {}]
  %s2 = inlined_call_operand.hbm [shape: f32[32,32], index: 2, kind: input, shape index: {}]
  %s3 = inlined_call_operand.hbm [shape: f32[32,32], index: 3, kind: input, shape index: {}]
  %s4 = inlined_call_operand.vmem [shape: f32[1,32], index: 4, kind: input, shape index: {}]
  %s5 = inlined_call_operand.vmem [shape: f32[1,32], index: 5, kind: input, shape index: {}]
  %s6 = inlined_call_operand.vmem [shape: f32[1,32], index: 6, kind: input, shape index: {}]
  %s7 = inlined_call_operand.vmem [shape: f32[1,32], index: 7, kind: input, shape index: {}]
  %s8 = inlined_call_operand.hbm [shape: f32[32,32], index: 8, kind: input, shape index: {}]
  %s9 = inlined_call_operand.vmem [shape: f32[1,32], index: 9, kind: input, shape index: {}]
  %s10 = inlined_call_operand.hbm [shape: f32[2,16,32], index: 10, kind: output, shape index: {}]
  %s11 = sld [smem:[#allocation0]]
  $region97: #{tpu_custom_call.1} parent=0
    _
  %s13 = ssub.s32 1, %s11
  %s14 = scalar_select 0, %s13, %s11
  $region1: #{tpu_custom_call.1} parent=0
    #allocation4 [shape = 'u8[8192]{0}', space=vmem, size = 0x2000, scoped, tag = 'input window, operand 0']
    #allocation5 [shape = 's32[2]{0}', space=sflag, size = 0x8, scoped, tag = 'scoped memory for tpu_custom_call.1']
    #allocation6 [shape = 's32[2]{0}', space=sflag, size = 0x8, scoped, tag = 'scoped memory for tpu_custom_call.1']
    #allocation7 [shape = 'u8[16384]{0}', space=vmem, size = 0x4000, scoped, tag = 'input window, operand 1']
    #allocation8 [shape = 's32[2]{0}', space=sflag, size = 0x8, scoped, tag = 'scoped memory for tpu_custom_call.1']
    #allocation9 [shape = 'u8[16384]{0}', space=vmem, size = 0x4000, scoped, tag = 'input window, operand 2, single buffered']
    #allocation10 [shape = 'u8[16384]{0}', space=vmem, size = 0x4000, scoped, tag = 'input window, operand 3, single buffered']
    #allocation11 [shape = 's32[1]{0}', space=sflag, size = 0x4, scoped, tag = 'scoped memory for tpu_custom_call.1']
    #allocation12 [shape = 'u8[16384]{0}', space=vmem, size = 0x4000, scoped, tag = 'input window, operand 8, single buffered']
    #allocation13 [shape = 'u8[8192]{0}', space=vmem, size = 0x2000, scoped, tag = 'output window, operand 0']
    %15 = vsyncpa [#allocation5], 0
    %s16 = scalar_lea.sflag [#allocation5], 1
    %17 = vsyncpa %s16, 0
    %18 = vsyncpa [#allocation8], 0
    %s19 = scalar_lea.sflag [#allocation8], 1
    %20 = vsyncpa %s19, 0
    %21 = vsyncpa [#allocation11], 0
    %22 = vsyncpa [#allocation6], 0
    %s23 = scalar_lea.sflag [#allocation6], 1
    %24 = vsyncpa %s23, 0
    loop: start=0, step=1, limit=6
    $region2: #{tpu_custom_call.1} parent=1 // loop_pre_header
      _
    $region3: #{tpu_custom_call.1} parent=1 // loop_header
      %s26 = sphi 0, %s30
      %p27 = scmp.ge.s32.totalorder %s26, 6
      %s33 = sphi 0, %s45
      %s34 = sphi 0, %s41
      %s35 = sphi 0, %s33
      %s36 = sphi 0, %s34
      %s37 = sphi 0, %s35
      %s38 = sphi 0, %s36
      %s50 = sphi 0, %s52
      %s53 = sphi 0, %s50
      %s54 = sphi 0, %s53
      %s70 = sphi 0, %s54
      %s76 = sphi 0, %s78
      %s79 = sphi 0, %s76
      %s80 = sphi 0, %s79
      %s96 = sphi 0, %s80
      %s100 = sphi 0, %s100
      %s102 = sphi 0, %s100
      %s103 = sphi 0, %s102
      %s117 = sphi 0, %s103
      %s121 = sphi 0, %s121
      %s123 = sphi 0, %s121
      %s124 = sphi 0, %s123
      %s138 = sphi 0, %s124
      %s142 = sphi 0, %s142
      %s144 = sphi 0, %s142
      %s145 = sphi 0, %s144
      %s159 = sphi 0, %s145
      %s163 = sphi 0, %s163
      %s165 = sphi 0, %s163
      %s166 = sphi 0, %s165
      %s180 = sphi 0, %s166
      %s184 = sphi 0, %s184
      %s186 = sphi 0, %s184
      %s187 = sphi 0, %s186
      %s201 = sphi 0, %s187
      %s205 = sphi 0, %s205
      %s207 = sphi 0, %s205
      %s208 = sphi 0, %s207
      %s222 = sphi 0, %s208
      %s226 = sphi 0, %s226
      %s228 = sphi 0, %s226
      %s229 = sphi 0, %s228
      %s243 = sphi 0, %s229
      %s247 = sphi 0, %s247
      %s249 = sphi 0, %s247
      %s250 = sphi 0, %s249
      %s264 = sphi 0, %s250
      %s272 = sphi 0, %s274
      %s275 = sphi 0, %s272
      %s276 = sphi 0, %s275
      %s292 = sphi 0, %s276
    $region4: #{tpu_custom_call.1} parent=1 // loop_header_branch
      %29 = sbr.rel (%p27) target = $region8
    $region5: #{tpu_custom_call.1} parent=1 // loop_body
      %s31 = ssub.s32 %s26, 1
      %s32 = ssub.s32 %s26, 2
      %s39 = sadd.s32 1, %s34
      %p40 = scmp.ge.s32.totalorder %s39, 2
      %s41 = scalar_select %p40, 0, %s39
      %s42 = sadd.s32 1, %s33
      %s43 = scalar_select %p40, %s42, %s33
      %p44 = scmp.ge.s32.totalorder %s43, 2
      %s45 = scalar_select %p44, 0, %s43
      %s46 = ssub.s32 %s33, %s45
      %s47 = ssub.s32 %s34, %s41
      %s48 = sor.u32 %s46, %s47
      %p49 = scmp.eq.s32.totalorder %s48, 0
      %s51 = sadd.s32 %s50, 1
      %s52 = scalar_select %p49, %s50, %s51
      %p55 = pneg %p49
      %p56 = scmp.eq.s32.totalorder %s26, 3
      %p57 = por %p55, %p56
      %p58 = scmp.ne.s32.totalorder %s50, %s53
      %p59 = scmp.eq.s32.totalorder %s26, 0
      %p60 = por %p58, %p59
      %p61 = scmp.ne.s32.totalorder %s50, %s53
      %p62 = scmp.eq.s32.totalorder %s31, 3
      %p63 = por %p61, %p62
      %p64 = scmp.ne.s32.totalorder %s53, %s54
      %p65 = scmp.eq.s32.totalorder %s31, 0
      %p66 = por %p64, %p65
      %p67 = scmp.ne.s32.totalorder %s53, %s54
      %p68 = scmp.eq.s32.totalorder %s32, 3
      %p69 = por %p67, %p68
      %p71 = scmp.ne.s32.totalorder %s54, %s70
      %p72 = scmp.eq.s32.totalorder %s32, 0
      %p73 = por %p71, %p72
      %s74 = ssub.s32 %s33, %s45
      %p75 = scmp.eq.s32.totalorder %s74, 0
      %s77 = sadd.s32 %s76, 1
      %s78 = scalar_select %p75, %s76, %s77
      %p81 = pneg %p75
      %p82 = scmp.eq.s32.totalorder %s26, 3
      %p83 = por %p81, %p82
      %p84 = scmp.ne.s32.totalorder %s76, %s79
      %p85 = scmp.eq.s32.totalorder %s26, 0
      %p86 = por %p84, %p85
      %p87 = scmp.ne.s32.totalorder %s76, %s79
      %p88 = scmp.eq.s32.totalorder %s31, 3
      %p89 = por %p87, %p88
      %p90 = scmp.ne.s32.totalorder %s79, %s80
      %p91 = scmp.eq.s32.totalorder %s31, 0
      %p92 = por %p90, %p91
      %p93 = scmp.ne.s32.totalorder %s79, %s80
      %p94 = scmp.eq.s32.totalorder %s32, 3
      %p95 = por %p93, %p94
      %p97 = scmp.ne.s32.totalorder %s80, %s96
      %p98 = scmp.eq.s32.totalorder %s32, 0
      %p99 = por %p97, %p98
      %s101 = sadd.s32 %s100, 1
      %p104 = scmp.eq.s32.totalorder %s26, 3
      %p105 = scmp.ne.s32.totalorder %s100, %s102
      %p106 = scmp.eq.s32.totalorder %s26, 0
      %p107 = por %p105, %p106
      %p108 = scmp.ne.s32.totalorder %s100, %s102
      %p109 = scmp.eq.s32.totalorder %s31, 3
      %p110 = por %p108, %p109
      %p111 = scmp.ne.s32.totalorder %s102, %s103
      %p112 = scmp.eq.s32.totalorder %s31, 0
      %p113 = por %p111, %p112
      %p114 = scmp.ne.s32.totalorder %s102, %s103
      %p115 = scmp.eq.s32.totalorder %s32, 3
      %p116 = por %p114, %p115
      %p118 = scmp.ne.s32.totalorder %s103, %s117
      %p119 = scmp.eq.s32.totalorder %s32, 0
      %p120 = por %p118, %p119
      %s122 = sadd.s32 %s121, 1
      %p125 = scmp.eq.s32.totalorder %s26, 3
      %p126 = scmp.ne.s32.totalorder %s121, %s123
      %p127 = scmp.eq.s32.totalorder %s26, 0
      %p128 = por %p126, %p127
      %p129 = scmp.ne.s32.totalorder %s121, %s123
      %p130 = scmp.eq.s32.totalorder %s31, 3
      %p131 = por %p129, %p130
      %p132 = scmp.ne.s32.totalorder %s123, %s124
      %p133 = scmp.eq.s32.totalorder %s31, 0
      %p134 = por %p132, %p133
      %p135 = scmp.ne.s32.totalorder %s123, %s124
      %p136 = scmp.eq.s32.totalorder %s32, 3
      %p137 = por %p135, %p136
      %p139 = scmp.ne.s32.totalorder %s124, %s138
      %p140 = scmp.eq.s32.totalorder %s32, 0
      %p141 = por %p139, %p140
      %s143 = sadd.s32 %s142, 1
      %p146 = scmp.eq.s32.totalorder %s26, 3
      %p147 = scmp.ne.s32.totalorder %s142, %s144
      %p148 = scmp.eq.s32.totalorder %s26, 0
      %p149 = por %p147, %p148
      %p150 = scmp.ne.s32.totalorder %s142, %s144
      %p151 = scmp.eq.s32.totalorder %s31, 3
      %p152 = por %p150, %p151
      %p153 = scmp.ne.s32.totalorder %s144, %s145
      %p154 = scmp.eq.s32.totalorder %s31, 0
      %p155 = por %p153, %p154
      %p156 = scmp.ne.s32.totalorder %s144, %s145
      %p157 = scmp.eq.s32.totalorder %s32, 3
      %p158 = por %p156, %p157
      %p160 = scmp.ne.s32.totalorder %s145, %s159
      %p161 = scmp.eq.s32.totalorder %s32, 0
      %p162 = por %p160, %p161
      %s164 = sadd.s32 %s163, 1
      %p167 = scmp.eq.s32.totalorder %s26, 3
      %p168 = scmp.ne.s32.totalorder %s163, %s165
      %p169 = scmp.eq.s32.totalorder %s26, 0
      %p170 = por %p168, %p169
      %p171 = scmp.ne.s32.totalorder %s163, %s165
      %p172 = scmp.eq.s32.totalorder %s31, 3
      %p173 = por %p171, %p172
      %p174 = scmp.ne.s32.totalorder %s165, %s166
      %p175 = scmp.eq.s32.totalorder %s31, 0
      %p176 = por %p174, %p175
      %p177 = scmp.ne.s32.totalorder %s165, %s166
      %p178 = scmp.eq.s32.totalorder %s32, 3
      %p179 = por %p177, %p178
      %p181 = scmp.ne.s32.totalorder %s166, %s180
      %p182 = scmp.eq.s32.totalorder %s32, 0
      %p183 = por %p181, %p182
      %s185 = sadd.s32 %s184, 1
      %p188 = scmp.eq.s32.totalorder %s26, 3
      %p189 = scmp.ne.s32.totalorder %s184, %s186
      %p190 = scmp.eq.s32.totalorder %s26, 0
      %p191 = por %p189, %p190
      %p192 = scmp.ne.s32.totalorder %s184, %s186
      %p193 = scmp.eq.s32.totalorder %s31, 3
      %p194 = por %p192, %p193
      %p195 = scmp.ne.s32.totalorder %s186, %s187
      %p196 = scmp.eq.s32.totalorder %s31, 0
      %p197 = por %p195, %p196
      %p198 = scmp.ne.s32.totalorder %s186, %s187
      %p199 = scmp.eq.s32.totalorder %s32, 3
      %p200 = por %p198, %p199
      %p202 = scmp.ne.s32.totalorder %s187, %s201
      %p203 = scmp.eq.s32.totalorder %s32, 0
      %p204 = por %p202, %p203
      %s206 = sadd.s32 %s205, 1
      %p209 = scmp.eq.s32.totalorder %s26, 3
      %p210 = scmp.ne.s32.totalorder %s205, %s207
      %p211 = scmp.eq.s32.totalorder %s26, 0
      %p212 = por %p210, %p211
      %p213 = scmp.ne.s32.totalorder %s205, %s207
      %p214 = scmp.eq.s32.totalorder %s31, 3
      %p215 = por %p213, %p214
      %p216 = scmp.ne.s32.totalorder %s207, %s208
      %p217 = scmp.eq.s32.totalorder %s31, 0
      %p218 = por %p216, %p217
      %p219 = scmp.ne.s32.totalorder %s207, %s208
      %p220 = scmp.eq.s32.totalorder %s32, 3
      %p221 = por %p219, %p220
      %p223 = scmp.ne.s32.totalorder %s208, %s222
      %p224 = scmp.eq.s32.totalorder %s32, 0
      %p225 = por %p223, %p224
      %s227 = sadd.s32 %s226, 1
      %p230 = scmp.eq.s32.totalorder %s26, 3
      %p231 = scmp.ne.s32.totalorder %s226, %s228
      %p232 = scmp.eq.s32.totalorder %s26, 0
      %p233 = por %p231, %p232
      %p234 = scmp.ne.s32.totalorder %s226, %s228
      %p235 = scmp.eq.s32.totalorder %s31, 3
      %p236 = por %p234, %p235
      %p237 = scmp.ne.s32.totalorder %s228, %s229
      %p238 = scmp.eq.s32.totalorder %s31, 0
      %p239 = por %p237, %p238
      %p240 = scmp.ne.s32.totalorder %s228, %s229
      %p241 = scmp.eq.s32.totalorder %s32, 3
      %p242 = por %p240, %p241
      %p244 = scmp.ne.s32.totalorder %s229, %s243
      %p245 = scmp.eq.s32.totalorder %s32, 0
      %p246 = por %p244, %p245
      %s248 = sadd.s32 %s247, 1
      %p251 = scmp.eq.s32.totalorder %s26, 3
      %p252 = scmp.ne.s32.totalorder %s247, %s249
      %p253 = scmp.eq.s32.totalorder %s26, 0
      %p254 = por %p252, %p253
      %p255 = scmp.ne.s32.totalorder %s247, %s249
      %p256 = scmp.eq.s32.totalorder %s31, 3
      %p257 = por %p255, %p256
      %p258 = scmp.ne.s32.totalorder %s249, %s250
      %p259 = scmp.eq.s32.totalorder %s31, 0
      %p260 = por %p258, %p259
      %p261 = scmp.ne.s32.totalorder %s249, %s250
      %p262 = scmp.eq.s32.totalorder %s32, 3
      %p263 = por %p261, %p262
      %p265 = scmp.ne.s32.totalorder %s250, %s264
      %p266 = scmp.eq.s32.totalorder %s32, 0
      %p267 = por %p265, %p266
      %s268 = ssub.s32 %s33, %s45
      %s269 = ssub.s32 %s34, %s41
      %s270 = sor.u32 %s268, %s269
      %p271 = scmp.eq.s32.totalorder %s270, 0
      %s273 = sadd.s32 %s272, 1
      %s274 = scalar_select %p271, %s272, %s273
      %p277 = pneg %p271
      %p278 = scmp.eq.s32.totalorder %s26, 3
      %p279 = por %p277, %p278
      %p280 = scmp.ne.s32.totalorder %s272, %s275
      %p281 = scmp.eq.s32.totalorder %s26, 0
      %p282 = por %p280, %p281
      %p283 = scmp.ne.s32.totalorder %s272, %s275
      %p284 = scmp.eq.s32.totalorder %s31, 3
      %p285 = por %p283, %p284
      %p286 = scmp.ne.s32.totalorder %s275, %s276
      %p287 = scmp.eq.s32.totalorder %s31, 0
      %p288 = por %p286, %p287
      %p289 = scmp.ne.s32.totalorder %s275, %s276
      %p290 = scmp.eq.s32.totalorder %s32, 3
      %p291 = por %p289, %p290
      %p293 = scmp.ne.s32.totalorder %s276, %s292
      %p294 = scmp.eq.s32.totalorder %s32, 0
      %p295 = por %p293, %p294
      %p296 = scmp.le.s32.totalorder 1, %s26
      %p297 = scmp.lt.s32.totalorder %s26, 5
      %p298 = pnand %p296, %p297
      %p299 = pneg %p298
      // Predicated region
      $region9: #{tpu_custom_call.1} parent=5 // pred_check
        _
      $region10: #{tpu_custom_call.1} parent=5 // pred_check_branch
        %301 = sbr.rel (%p298) target = $region12
      $region11: #{tpu_custom_call.1} parent=5 // pred_region
        %s302 = ssub.s32 %s26, 1
        // Predicated region
        $region13: #{tpu_custom_call.1} parent=11 // pred_check
          %p303 = pneg %p113
        $region14: #{tpu_custom_call.1} parent=11 // pred_check_branch
          %305 = sbr.rel (%p303) target = $region16
        $region15: #{tpu_custom_call.1} parent=11 // pred_region
          %307 = vsyncadd [#allocation8], 0
          %s308 = sshll.u32 %s2, 4
          %s309 = int_to_ptr.hbm [resolvable:$true] %s308
          %s310 = sshll.u32 [#allocation9], 4
          %s311 = int_to_ptr.vmem [resolvable:$true] %s310
          %316 = dma.hbm_to_vmem [thread:$0]  %s309, 512, %s311, [#allocation8], 128, 128, 8
        $region16: #{tpu_custom_call.1} parent=11 // pred_fallthru
          _
        // Predicated region
        $region17: #{tpu_custom_call.1} parent=11 // pred_check
          %p317 = pneg %p134
        $region18: #{tpu_custom_call.1} parent=11 // pred_check_branch
          %319 = sbr.rel (%p317) target = $region20
        $region19: #{tpu_custom_call.1} parent=11 // pred_region
          %321 = vsyncadd [#allocation11], 0
          %s322 = sshll.u32 %s3, 4
          %s323 = int_to_ptr.hbm [resolvable:$true] %s322
          %s324 = sshll.u32 [#allocation10], 4
          %s325 = int_to_ptr.vmem [resolvable:$true] %s324
          %330 = dma.hbm_to_vmem [thread:$0]  %s323, 512, %s325, [#allocation11], 128, 128, 8
        $region20: #{tpu_custom_call.1} parent=11 // pred_fallthru
          _
        // Predicated region
        $region21: #{tpu_custom_call.1} parent=11 // pred_check
          %p331 = pneg %p155
        $region22: #{tpu_custom_call.1} parent=11 // pred_check_branch
          %333 = sbr.rel (%p331) target = $region24
        $region23: #{tpu_custom_call.1} parent=11 // pred_region
          _
        $region24: #{tpu_custom_call.1} parent=11 // pred_fallthru
          _
        // Predicated region
        $region25: #{tpu_custom_call.1} parent=11 // pred_check
          %p334 = pneg %p176
        $region26: #{tpu_custom_call.1} parent=11 // pred_check_branch
          %336 = sbr.rel (%p334) target = $region28
        $region27: #{tpu_custom_call.1} parent=11 // pred_region
          _
        $region28: #{tpu_custom_call.1} parent=11 // pred_fallthru
          _
        // Predicated region
        $region29: #{tpu_custom_call.1} parent=11 // pred_check
          %p337 = pneg %p197
        $region30: #{tpu_custom_call.1} parent=11 // pred_check_branch
          %339 = sbr.rel (%p337) target = $region32
        $region31: #{tpu_custom_call.1} parent=11 // pred_region
          _
        $region32: #{tpu_custom_call.1} parent=11 // pred_fallthru
          _
        // Predicated region
        $region33: #{tpu_custom_call.1} parent=11 // pred_check
          %p340 = pneg %p218
        $region34: #{tpu_custom_call.1} parent=11 // pred_check_branch
          %342 = sbr.rel (%p340) target = $region36
        $region35: #{tpu_custom_call.1} parent=11 // pred_region
          _
        $region36: #{tpu_custom_call.1} parent=11 // pred_fallthru
          _
        // Predicated region
        $region37: #{tpu_custom_call.1} parent=11 // pred_check
          %p343 = pneg %p239
        $region38: #{tpu_custom_call.1} parent=11 // pred_check_branch
          %345 = sbr.rel (%p343) target = $region40
        $region39: #{tpu_custom_call.1} parent=11 // pred_region
          %347 = vsyncadd [#allocation11], 0
          %s348 = sshll.u32 %s8, 4
          %s349 = int_to_ptr.hbm [resolvable:$true] %s348
          %s350 = sshll.u32 [#allocation12], 4
          %s351 = int_to_ptr.vmem [resolvable:$true] %s350
          %356 = dma.hbm_to_vmem [thread:$0]  %s349, 512, %s351, [#allocation11], 128, 128, 8
        $region40: #{tpu_custom_call.1} parent=11 // pred_fallthru
          _
        // Predicated region
        $region41: #{tpu_custom_call.1} parent=11 // pred_check
          %p357 = pneg %p260
        $region42: #{tpu_custom_call.1} parent=11 // pred_check_branch
          %359 = sbr.rel (%p357) target = $region44
        $region43: #{tpu_custom_call.1} parent=11 // pred_region
          _
        $region44: #{tpu_custom_call.1} parent=11 // pred_fallthru
          _
      $region12: #{tpu_custom_call.1} parent=5 // pred_fallthru
        _
      %p360 = scmp.lt.s32.totalorder %s26, 4
      // Predicated region
      $region45: #{tpu_custom_call.1} parent=5 // pred_check
        %p361 = pneg %p360
      $region46: #{tpu_custom_call.1} parent=5 // pred_check_branch
        %363 = sbr.rel (%p361) target = $region48
      $region47: #{tpu_custom_call.1} parent=5 // pred_region
        // Predicated region
        $region49: #{tpu_custom_call.1} parent=47 // pred_check
          %p364 = pneg %p60
        $region50: #{tpu_custom_call.1} parent=47 // pred_check_branch
          %366 = sbr.rel (%p364) target = $region52
        $region51: #{tpu_custom_call.1} parent=47 // pred_region
          %s367 = sand.u32 %s50, 1
          %s368 = scalar_lea.sflag [#allocation5], %s367
          %s369 = sand.u32 %s50, 1
          %s370 = smul.addr %s369, 8
          %s371 = scalar_lea.vmem [#allocation4], %s370
          %373 = vsyncadd %s368, 0
          %s374 = smul.addr %s33, 2
          %s375 = sadd.s32 %s34, %s374
          %s376 = smul.addr %s375, 8
          %s377 = scalar_lea.hbm %s0, %s376
          %s379 = sshll.u32 %s377, 4
          %s380 = int_to_ptr.hbm [resolvable:$true] %s379
          %s381 = sshll.u32 %s371, 4
          %s382 = int_to_ptr.vmem [resolvable:$true] %s381
          %384 = dma.hbm_to_vmem [thread:$0]  %s380, 128, %s382, %s368
        $region52: #{tpu_custom_call.1} parent=47 // pred_fallthru
          _
        // Predicated region
        $region53: #{tpu_custom_call.1} parent=47 // pred_check
          %p385 = pneg %p86
        $region54: #{tpu_custom_call.1} parent=47 // pred_check_branch
          %387 = sbr.rel (%p385) target = $region56
        $region55: #{tpu_custom_call.1} parent=47 // pred_region
          %s388 = sand.u32 %s26, 1
          %s389 = scalar_lea.sflag [#allocation8], %s388
          %s390 = sand.u32 %s76, 1
          %s391 = smul.addr %s390, 16
          %s392 = scalar_lea.vmem [#allocation7], %s391
          %394 = vsyncadd %s389, 0
          %s395 = smul.addr %s33, 2
          %s396 = smul.addr %s395, 8
          %s397 = scalar_lea.hbm %s1, %s396
          %s398 = sshll.u32 %s397, 4
          %s399 = int_to_ptr.hbm [resolvable:$true] %s398
          %s400 = sshll.u32 %s392, 4
          %s401 = int_to_ptr.vmem [resolvable:$true] %s400
          %406 = dma.hbm_to_vmem [thread:$0]  %s399, 256, %s401, %s389, 128, 128, 8
        $region56: #{tpu_custom_call.1} parent=47 // pred_fallthru
          _
      $region48: #{tpu_custom_call.1} parent=5 // pred_fallthru
        _
      %p407 = scmp.le.s32.totalorder 1, %s26
      %p408 = scmp.lt.s32.totalorder %s26, 5
      %p409 = pnand %p407, %p408
      %p410 = pneg %p409
      // Predicated region
      $region57: #{tpu_custom_call.1} parent=5 // pred_check
        _
      $region58: #{tpu_custom_call.1} parent=5 // pred_check_branch
        %412 = sbr.rel (%p409) target = $region60
      $region59: #{tpu_custom_call.1} parent=5 // pred_region
        %s413 = ssub.s32 %s26, 1
        %s414 = sand.u32 %s53, 1
        %s415 = scalar_lea.sflag [#allocation5], %s414
        %s416 = sand.u32 %s53, 1
        %s417 = smul.addr %s416, 8
        %s418 = scalar_lea.vmem [#allocation4], %s417
        // Predicated region
        $region61: #{tpu_custom_call.1} parent=59 // pred_check
          %p419 = pneg %p66
        $region62: #{tpu_custom_call.1} parent=59 // pred_check_branch
          %421 = sbr.rel (%p419) target = $region64
        $region63: #{tpu_custom_call.1} parent=59 // pred_region
          %423 = dma.done %s415, 128
        $region64: #{tpu_custom_call.1} parent=59 // pred_fallthru
          _
        %s424 = sand.u32 %s31, 1
        %s425 = scalar_lea.sflag [#allocation8], %s424
        %s426 = sand.u32 %s79, 1
        %s427 = smul.addr %s426, 16
        %s428 = scalar_lea.vmem [#allocation7], %s427
        // Predicated region
        $region65: #{tpu_custom_call.1} parent=59 // pred_check
          %p429 = pneg %p92
        $region66: #{tpu_custom_call.1} parent=59 // pred_check_branch
          %431 = sbr.rel (%p429) target = $region68
        $region67: #{tpu_custom_call.1} parent=59 // pred_region
          %433 = dma.done %s425, 256
        $region68: #{tpu_custom_call.1} parent=59 // pred_fallthru
          _
        // Predicated region
        $region69: #{tpu_custom_call.1} parent=59 // pred_check
          %p434 = pneg %p113
        $region70: #{tpu_custom_call.1} parent=59 // pred_check_branch
          %436 = sbr.rel (%p434) target = $region72
        $region71: #{tpu_custom_call.1} parent=59 // pred_region
          %438 = dma.done [#allocation8], 512
        $region72: #{tpu_custom_call.1} parent=59 // pred_fallthru
          _
        // Predicated region
        $region73: #{tpu_custom_call.1} parent=59 // pred_check
          %p439 = pneg %p134
        $region74: #{tpu_custom_call.1} parent=59 // pred_check_branch
          %441 = sbr.rel (%p439) target = $region76
        $region75: #{tpu_custom_call.1} parent=59 // pred_region
          %443 = dma.done [#allocation11], 512
        $region76: #{tpu_custom_call.1} parent=59 // pred_fallthru
          _
        // Predicated region
        $region77: #{tpu_custom_call.1} parent=59 // pred_check
          %p444 = pneg %p239
        $region78: #{tpu_custom_call.1} parent=59 // pred_check_branch
          %446 = sbr.rel (%p444) target = $region80
        $region79: #{tpu_custom_call.1} parent=59 // pred_region
          %448 = dma.done [#allocation11], 512
        $region80: #{tpu_custom_call.1} parent=59 // pred_fallthru
          _
        %s449 = sand.u32 %s53, 1
        %s450 = scalar_lea.sflag [#allocation5], %s449
        %s451 = sand.u32 %s53, 1
        %s452 = smul.addr %s451, 8
        %s453 = scalar_lea.vmem [#allocation4], %s452
        %p454 = pneg %p66
        %p455 = pneg %p63
        %s456 = sand.u32 %s31, 1
        %s457 = scalar_lea.sflag [#allocation8], %s456
        %s458 = sand.u32 %s79, 1
        %s459 = smul.addr %s458, 16
        %s460 = scalar_lea.vmem [#allocation7], %s459
        %p461 = pneg %p92
        %p462 = pneg %p89
        %p463 = pneg %p113
        %p464 = pneg %p110
        %p465 = pneg %p134
        %p466 = pneg %p131
        %p467 = pneg %p155
        %p468 = pneg %p152
        %p469 = pneg %p176
        %p470 = pneg %p173
        %p471 = pneg %p197
        %p472 = pneg %p194
        %p473 = pneg %p218
        %p474 = pneg %p215
        %p475 = pneg %p239
        %p476 = pneg %p236
        %p477 = pneg %p260
        %p478 = pneg %p257
        %p479 = pneg %p288
        %p480 = pneg %p285
        %s481 = sand.u32 %s275, 1
        %s482 = scalar_lea.sflag [#allocation6], %s481
        %s483 = sand.u32 %s275, 1
        %s484 = smul.addr %s483, 8
        %s485 = scalar_lea.vmem [#allocation13], %s484
        %p486 = scmp.eq.s32.totalorder %s36, 0
        // Predicated region
        $region81: #{tpu_custom_call.1} parent=59 // pred_check
          %p487 = pneg %p486
        $region82: #{tpu_custom_call.1} parent=59 // pred_check_branch
          %489 = sbr.rel (%p487) target = $region84
        $region83: #{tpu_custom_call.1} parent=59 // pred_region
          %v490 = vld [vmem:[%s428] sm:$0xff]
          %v491 = vld [vmem:[%s428 + $0x8] sm:$0xff]
          %v492 = vld [vmem:[#allocation9] sm:$0xff]
          %v493 = vld [vmem:[#allocation9 + $0x8] sm:$0xff]
          %v494 = vld [vmem:[#allocation9 + $0x10] sm:$0xff]
          %v495 = vld [vmem:[#allocation9 + $0x18] sm:$0xff]
          %vm496 = vcmask 261120
          %v498 = vsel %vm496, %v490, 0
          %v501 = vsel %vm496, %v491, 0
          %503 = vmatpush.msra.mxu0 0.0
          %504 = vmatpush.msra.mxu0 0.0
          %505 = vmatpush.msra.mxu0 0.0
          %506 = vmatpush.msra.mxu0 0.0
          %507 = vmatpush.msra.mxu0 0.0
          %508 = vmatpush.msra.mxu0 0.0
          %509 = vmatpush.msra.mxu0 0.0
          %510 = vmatpush.msra.mxu0 0.0
          %511 = vmatpush.msra.mxu0 0.0
          %512 = vmatpush.msra.mxu0 0.0
          %513 = vmatpush.msra.mxu0 0.0
          %514 = vmatpush.msra.mxu0 0.0
          %515 = vmatpush.msra.mxu0 %v495
          %516 = vmatpush.msra.mxu0 %v494
          %517 = vmatpush.msra.mxu0 %v493
          %518 = vmatpush.msra.mxu0 %v492
          %519 = vmatmul.f32.gmra.mxu0 %v498
          %v520 = vpop.f32.mrf.mxu0
          %v521 = vadd.f32 0.0, %v520
          %522 = vmatmul.f32.gmra.mxu0 %v501
          %v523 = vpop.f32.mrf.mxu0
          %v524 = vadd.f32 0.0, %v523
          %525 = vdwg.mxu0
          %v526 = vld [vmem:[#allocation10] sm:$0xff]
          %v527 = vld [vmem:[#allocation10 + $0x8] sm:$0xff]
          %v528 = vld [vmem:[#allocation10 + $0x10] sm:$0xff]
          %v529 = vld [vmem:[#allocation10 + $0x18] sm:$0xff]
          %530 = vmatpush.msra.mxu0 0.0
          %531 = vmatpush.msra.mxu0 0.0
          %532 = vmatpush.msra.mxu0 0.0
          %533 = vmatpush.msra.mxu0 0.0
          %534 = vmatpush.msra.mxu0 0.0
          %535 = vmatpush.msra.mxu0 0.0
          %536 = vmatpush.msra.mxu0 0.0
          %537 = vmatpush.msra.mxu0 0.0
          %538 = vmatpush.msra.mxu0 0.0
          %539 = vmatpush.msra.mxu0 0.0
          %540 = vmatpush.msra.mxu0 0.0
          %541 = vmatpush.msra.mxu0 0.0
          %542 = vmatpush.msra.mxu0 %v529
          %543 = vmatpush.msra.mxu0 %v528
          %544 = vmatpush.msra.mxu0 %v527
          %545 = vmatpush.msra.mxu0 %v526
          %546 = vmatmul.f32.gmra.mxu0 %v498
          %v547 = vpop.f32.mrf.mxu0
          %v548 = vadd.f32 0.0, %v547
          %549 = vmatmul.f32.gmra.mxu0 %v501
          %v550 = vpop.f32.mrf.mxu0
          %v551 = vadd.f32 0.0, %v550
          %552 = vdwg.mxu0
          %v553 = vld [vmem:[%s6] sm:$0x1]
          %v554 = vld [vmem:[%s7] sm:$0x1]
          %v555 = vsel %vm496, %v521, 0.0
          %556 = vadd.xlane.f32.xlu0 %v555
          %v557 = vpop.xlane.xlu0 %556
          %v558 = vsel %vm496, %v524, 0.0
          %559 = vadd.xlane.f32.xlu0 %v558
          %v560 = vpop.xlane.xlu0 %559
          %v561 = vrcp.pop 32.0
          %v562 = vmul.f32 32.0, %v561
          %v563 = vsub.f32 1.0, %v562
          %v564 = vmul.f32 %v561, %v563
          %v565 = vadd.f32 %v561, %v564
          %vm566 = vweird.f32 %v561
          %v567 = vsel %vm566, %v561, %v565
          %v568 = vmul.f32 %v557, %v567
          %v569 = vmul.f32 %v560, %v567
          %v570 = vsub.f32 %v521, %v568
          %v571 = vsub.f32 %v524, %v569
          %v572 = vmul.f32 %v570, %v570
          %v573 = vmul.f32 %v571, %v571
          %v574 = vsel %vm496, %v572, 0.0
          %575 = vadd.xlane.f32.xlu0 %v574
          %v576 = vpop.xlane.xlu0 %575
          %v577 = vsel %vm496, %v573, 0.0
          %578 = vadd.xlane.f32.xlu0 %v577
          %v579 = vpop.xlane.xlu0 %578
          %v580 = vmul.f32 %v576, %v567
          %v581 = vmul.f32 %v579, %v567
          %v582 = vadd.f32 %v580, 1e-06
          %v583 = vadd.f32 %v581, 1e-06
          %v584 = vrsqrt.pop %v582
          %v585 = vmul.f32 %v584, %v582
          %v586 = vmul.f32 %v585, %v584
          %v587 = vmul.f32 0.5, %v586
          %v588 = vsub.f32 1.5, %v587
          %v589 = vmul.f32 %v584, %v588
          %vm590 = vweird.f32 %v582
          %vm591 = vweird.f32 %v584
          %vm592 = vmor %vm590, %vm591
          %v593 = vsel %vm592, %v584, %v589
          %v594 = vrsqrt.pop %v583
          %v595 = vmul.f32 %v594, %v583
          %v596 = vmul.f32 %v595, %v594
          %v597 = vmul.f32 0.5, %v596
          %v598 = vsub.f32 1.5, %v597
          %v599 = vmul.f32 %v594, %v598
          %vm600 = vweird.f32 %v583
          %vm601 = vweird.f32 %v594
          %vm602 = vmor %vm600, %vm601
          %v603 = vsel %vm602, %v594, %v599
          %v604 = vmul.f32 %v570, %v593
          %v605 = vmul.f32 %v571, %v603
          %v607 = vperm.slane %v553, 0
          %v609 = vmul.f32 %v604, %v607
          %v610 = vmul.f32 %v605, %v607
          %v612 = vperm.slane %v554, 0
          %v614 = vadd.f32 %v609, %v612
          %v615 = vadd.f32 %v610, %v612
          %618 = vrot.lane.b32.xlu0 %v614, 120
          %v619 = vpop.permute.xlu0 %618
          %620 = vrot.lane.b32.xlu0 %v615, 120
          %v621 = vpop.permute.xlu0 %620
          %624 = vrot.lane.b32.xlu0 %v614, 112
          %v625 = vpop.permute.xlu0 %624
          %626 = vrot.lane.b32.xlu0 %v615, 112
          %v627 = vpop.permute.xlu0 %626
          %630 = vrot.lane.b32.xlu0 %v614, 104
          %v631 = vpop.permute.xlu0 %630
          %632 = vrot.lane.b32.xlu0 %v615, 104
          %v633 = vpop.permute.xlu0 %632
          %vm636 = vcmask 64512
          %637 = vst.msk [vmem:[#allocation2] sm:$0xff] %vm636, %v614
          %638 = vst.msk [vmem:[#allocation2 + $0x8] sm:$0xff] %vm636, %v615
          %639 = vst.msk [vmem:[#allocation2 + $0x10] sm:$0xff] %vm636, %v619
          %640 = vst.msk [vmem:[#allocation2 + $0x18] sm:$0xff] %vm636, %v621
          %641 = vst.msk [vmem:[#allocation2 + $0x20] sm:$0xff] %vm636, %v625
          %642 = vst.msk [vmem:[#allocation2 + $0x28] sm:$0xff] %vm636, %v627
          %643 = vst.msk [vmem:[#allocation2 + $0x30] sm:$0xff] %vm636, %v631
          %644 = vst.msk [vmem:[#allocation2 + $0x38] sm:$0xff] %vm636, %v633
          %647 = vrot.lane.b32.xlu0 %v548, 120
          %v648 = vpop.permute.xlu0 %647
          %649 = vrot.lane.b32.xlu0 %v551, 120
          %v650 = vpop.permute.xlu0 %649
          %653 = vrot.lane.b32.xlu0 %v548, 112
          %v654 = vpop.permute.xlu0 %653
          %655 = vrot.lane.b32.xlu0 %v551, 112
          %v656 = vpop.permute.xlu0 %655
          %659 = vrot.lane.b32.xlu0 %v548, 104
          %v660 = vpop.permute.xlu0 %659
          %661 = vrot.lane.b32.xlu0 %v551, 104
          %v662 = vpop.permute.xlu0 %661
          %665 = vst.msk [vmem:[#allocation3] sm:$0xff] %vm636, %v548
          %666 = vst.msk [vmem:[#allocation3 + $0x8] sm:$0xff] %vm636, %v551
          %667 = vst.msk [vmem:[#allocation3 + $0x10] sm:$0xff] %vm636, %v648
          %668 = vst.msk [vmem:[#allocation3 + $0x18] sm:$0xff] %vm636, %v650
          %669 = vst.msk [vmem:[#allocation3 + $0x20] sm:$0xff] %vm636, %v654
          %670 = vst.msk [vmem:[#allocation3 + $0x28] sm:$0xff] %vm636, %v656
          %671 = vst.msk [vmem:[#allocation3 + $0x30] sm:$0xff] %vm636, %v660
          %672 = vst.msk [vmem:[#allocation3 + $0x38] sm:$0xff] %vm636, %v662
        $region84: #{tpu_custom_call.1} parent=59 // pred_fallthru
          _
        %v673 = vld [vmem:[%s418] sm:$0xff]
        %v674 = vld [vmem:[%s4] sm:$0x1]
        %v675 = vld [vmem:[%s5] sm:$0x1]
        %vm676 = vcmask 261120
        %v677 = vsel %vm676, %v673, 0.0
        %678 = vadd.xlane.f32.xlu0 %v677
        %v679 = vpop.xlane.xlu0 %678
        %v680 = vrcp.pop 32.0
        %v681 = vmul.f32 32.0, %v680
        %v682 = vsub.f32 1.0, %v681
        %v683 = vmul.f32 %v680, %v682
        %v684 = vadd.f32 %v680, %v683
        %vm685 = vweird.f32 %v680
        %v686 = vsel %vm685, %v680, %v684
        %v687 = vmul.f32 %v679, %v686
        %v688 = vsub.f32 %v673, %v687
        %v689 = vmul.f32 %v688, %v688
        %v690 = vsel %vm676, %v689, 0.0
        %691 = vadd.xlane.f32.xlu0 %v690
        %v692 = vpop.xlane.xlu0 %691
        %v693 = vmul.f32 %v692, %v686
        %v694 = vadd.f32 %v693, 1e-06
        %v695 = vrsqrt.pop %v694
        %v696 = vmul.f32 %v695, %v694
        %v697 = vmul.f32 %v696, %v695
        %v698 = vmul.f32 0.5, %v697
        %v699 = vsub.f32 1.5, %v698
        %v700 = vmul.f32 %v695, %v699
        %vm701 = vweird.f32 %v694
        %vm702 = vweird.f32 %v695
        %vm703 = vmor %vm701, %vm702
        %v704 = vsel %vm703, %v695, %v700
        %v705 = vmul.f32 %v688, %v704
        %v707 = vperm.slane %v674, 0
        %v709 = vmul.f32 %v705, %v707
        %v711 = vperm.slane %v675, 0
        %v713 = vadd.f32 %v709, %v711
        %v714 = vmul.f32 %v713, 0.35355338
        %716 = vrot.lane.b32.xlu0 %v714, 120
        %v717 = vpop.permute.xlu0 %716
        %718 = vrot.lane.b32.xlu0 %v714, 112
        %v719 = vpop.permute.xlu0 %718
        %720 = vrot.lane.b32.xlu0 %v714, 104
        %v721 = vpop.permute.xlu0 %720
        %v722 = vld [vmem:[#allocation2] sm:$0xff]
        %v723 = vld [vmem:[#allocation2 + $0x8] sm:$0xff]
        %v724 = vld [vmem:[#allocation2 + $0x10] sm:$0xff]
        %v725 = vld [vmem:[#allocation2 + $0x18] sm:$0xff]
        %v726 = vld [vmem:[#allocation2 + $0x20] sm:$0xff]
        %v727 = vld [vmem:[#allocation2 + $0x28] sm:$0xff]
        %v728 = vld [vmem:[#allocation2 + $0x30] sm:$0xff]
        %v729 = vld [vmem:[#allocation2 + $0x38] sm:$0xff]
        %v730 = vld [vmem:[#allocation3] sm:$0xff]
        %v731 = vld [vmem:[#allocation3 + $0x8] sm:$0xff]
        %v732 = vld [vmem:[#allocation3 + $0x10] sm:$0xff]
        %v733 = vld [vmem:[#allocation3 + $0x18] sm:$0xff]
        %v734 = vld [vmem:[#allocation3 + $0x20] sm:$0xff]
        %v735 = vld [vmem:[#allocation3 + $0x28] sm:$0xff]
        %v736 = vld [vmem:[#allocation3 + $0x30] sm:$0xff]
        %v737 = vld [vmem:[#allocation3 + $0x38] sm:$0xff]
        %vm738 = vcmask 64512
        %v739 = vsel %vm738, %v714, 0
        %v742 = vsel %vm738, %v722, 0
        %v745 = vsel %vm738, %v723, 0
        %747 = vmatpush.xpose.msra.mxu0 0.0
        %748 = vmatpush.xpose.msra.mxu0 0.0
        %749 = vmatpush.xpose.msra.mxu0 0.0
        %750 = vmatpush.xpose.msra.mxu0 0.0
        %751 = vmatpush.xpose.msra.mxu0 0.0
        %752 = vmatpush.xpose.msra.mxu0 0.0
        %753 = vmatpush.xpose.msra.mxu0 0.0
        %754 = vmatpush.xpose.msra.mxu0 0.0
        %755 = vmatpush.xpose.msra.mxu0 0.0
        %756 = vmatpush.xpose.msra.mxu0 0.0
        %757 = vmatpush.xpose.msra.mxu0 0.0
        %758 = vmatpush.xpose.msra.mxu0 0.0
        %759 = vmatpush.xpose.msra.mxu0 0.0
        %760 = vmatpush.xpose.msra.mxu0 0.0
        %761 = vmatpush.xpose.msra.mxu0 %v745
        %762 = vmatpush.xpose.msra.mxu0 %v742
        %763 = vmatmul.f32.gmra.mxu0 %v739
        %v764 = vpop.f32.mrf.mxu0
        %v765 = vadd.f32 0.0, %v764
        %766 = vdwg.mxu0
        %v767 = vsel %vm738, %v717, 0
        %v770 = vsel %vm738, %v724, 0
        %v773 = vsel %vm738, %v725, 0
        %775 = vmatpush.xpose.msra.mxu0 0.0
        %776 = vmatpush.xpose.msra.mxu0 0.0
        %777 = vmatpush.xpose.msra.mxu0 0.0
        %778 = vmatpush.xpose.msra.mxu0 0.0
        %779 = vmatpush.xpose.msra.mxu0 0.0
        %780 = vmatpush.xpose.msra.mxu0 0.0
        %781 = vmatpush.xpose.msra.mxu0 0.0
        %782 = vmatpush.xpose.msra.mxu0 0.0
        %783 = vmatpush.xpose.msra.mxu0 0.0
        %784 = vmatpush.xpose.msra.mxu0 0.0
        %785 = vmatpush.xpose.msra.mxu0 0.0
        %786 = vmatpush.xpose.msra.mxu0 0.0
        %787 = vmatpush.xpose.msra.mxu0 0.0
        %788 = vmatpush.xpose.msra.mxu0 0.0
        %789 = vmatpush.xpose.msra.mxu0 %v773
        %790 = vmatpush.xpose.msra.mxu0 %v770
        %791 = vmatmul.f32.gmra.mxu0 %v767
        %v792 = vpop.f32.mrf.mxu0
        %v793 = vadd.f32 0.0, %v792
        %794 = vdwg.mxu0
        %v795 = vsel %vm738, %v719, 0
        %v798 = vsel %vm738, %v726, 0
        %v801 = vsel %vm738, %v727, 0
        %803 = vmatpush.xpose.msra.mxu0 0.0
        %804 = vmatpush.xpose.msra.mxu0 0.0
        %805 = vmatpush.xpose.msra.mxu0 0.0
        %806 = vmatpush.xpose.msra.mxu0 0.0
        %807 = vmatpush.xpose.msra.mxu0 0.0
        %808 = vmatpush.xpose.msra.mxu0 0.0
        %809 = vmatpush.xpose.msra.mxu0 0.0
        %810 = vmatpush.xpose.msra.mxu0 0.0
        %811 = vmatpush.xpose.msra.mxu0 0.0
        %812 = vmatpush.xpose.msra.mxu0 0.0
        %813 = vmatpush.xpose.msra.mxu0 0.0
        %814 = vmatpush.xpose.msra.mxu0 0.0
        %815 = vmatpush.xpose.msra.mxu0 0.0
        %816 = vmatpush.xpose.msra.mxu0 0.0
        %817 = vmatpush.xpose.msra.mxu0 %v801
        %818 = vmatpush.xpose.msra.mxu0 %v798
        %819 = vmatmul.f32.gmra.mxu0 %v795
        %v820 = vpop.f32.mrf.mxu0
        %v821 = vadd.f32 0.0, %v820
        %822 = vdwg.mxu0
        %v823 = vsel %vm738, %v721, 0
        %v826 = vsel %vm738, %v728, 0
        %v829 = vsel %vm738, %v729, 0
        %831 = vmatpush.xpose.msra.mxu0 0.0
        %832 = vmatpush.xpose.msra.mxu0 0.0
        %833 = vmatpush.xpose.msra.mxu0 0.0
        %834 = vmatpush.xpose.msra.mxu0 0.0
        %835 = vmatpush.xpose.msra.mxu0 0.0
        %836 = vmatpush.xpose.msra.mxu0 0.0
        %837 = vmatpush.xpose.msra.mxu0 0.0
        %838 = vmatpush.xpose.msra.mxu0 0.0
        %839 = vmatpush.xpose.msra.mxu0 0.0
        %840 = vmatpush.xpose.msra.mxu0 0.0
        %841 = vmatpush.xpose.msra.mxu0 0.0
        %842 = vmatpush.xpose.msra.mxu0 0.0
        %843 = vmatpush.xpose.msra.mxu0 0.0
        %844 = vmatpush.xpose.msra.mxu0 0.0
        %845 = vmatpush.xpose.msra.mxu0 %v829
        %846 = vmatpush.xpose.msra.mxu0 %v826
        %847 = vmatmul.f32.gmra.mxu0 %v823
        %v848 = vpop.f32.mrf.mxu0
        %v849 = vadd.f32 0.0, %v848
        %850 = vdwg.mxu0
        %vm851 = vcmask 130048
        %v852 = vsel %vm851, %v765, -inf
        %853 = vmax.xlane.f32.xlu0 %v852
        %v854 = vpop.xlane.xlu0 %853
        %v855 = vsel %vm851, %v793, -inf
        %856 = vmax.xlane.f32.xlu0 %v855
        %v857 = vpop.xlane.xlu0 %856
        %v858 = vsel %vm851, %v821, -inf
        %859 = vmax.xlane.f32.xlu0 %v858
        %v860 = vpop.xlane.xlu0 %859
        %v861 = vsel %vm851, %v849, -inf
        %862 = vmax.xlane.f32.xlu0 %v861
        %v863 = vpop.xlane.xlu0 %862
        %v864 = vsub.f32 %v765, %v854
        %v865 = vsub.f32 %v793, %v857
        %v866 = vsub.f32 %v821, %v860
        %v867 = vsub.f32 %v849, %v863
        %v868 = vmul.f32 %v864, 1.442695
        %v869 = vpow.pop %v868
        %v870 = vmul.f32 %v865, 1.442695
        %v871 = vpow.pop %v870
        %v872 = vmul.f32 %v866, 1.442695
        %v873 = vpow.pop %v872
        %v874 = vmul.f32 %v867, 1.442695
        %v875 = vpow.pop %v874
        %v876 = vsel %vm851, %v869, 0.0
        %877 = vadd.xlane.f32.xlu0 %v876
        %v878 = vpop.xlane.xlu0 %877
        %v879 = vsel %vm851, %v871, 0.0
        %880 = vadd.xlane.f32.xlu0 %v879
        %v881 = vpop.xlane.xlu0 %880
        %v882 = vsel %vm851, %v873, 0.0
        %883 = vadd.xlane.f32.xlu0 %v882
        %v884 = vpop.xlane.xlu0 %883
        %v885 = vsel %vm851, %v875, 0.0
        %886 = vadd.xlane.f32.xlu0 %v885
        %v887 = vpop.xlane.xlu0 %886
        %v888 = vrcp.pop %v878
        %v889 = vmul.f32 %v878, %v888
        %v890 = vsub.f32 1.0, %v889
        %v891 = vmul.f32 %v888, %v890
        %v892 = vadd.f32 %v888, %v891
        %vm893 = vweird.f32 %v878
        %vm894 = vweird.f32 %v888
        %vm895 = vmor %vm893, %vm894
        %v896 = vsel %vm895, %v888, %v892
        %v897 = vand.u32 2147483647, %v878
        %vm898 = vcmp.eq.f32.partialorder %v897, 8.507059e+37
        %v899 = vand.u32 %v878, 2147483648
        %v900 = vor.u32 1.1754944e-38, %v899
        %v901 = vsel %vm898, %v900, %v896
        %v902 = vrcp.pop %v881
        %v903 = vmul.f32 %v881, %v902
        %v904 = vsub.f32 1.0, %v903
        %v905 = vmul.f32 %v902, %v904
        %v906 = vadd.f32 %v902, %v905
        %vm907 = vweird.f32 %v881
        %vm908 = vweird.f32 %v902
        %vm909 = vmor %vm907, %vm908
        %v910 = vsel %vm909, %v902, %v906
        %v911 = vand.u32 2147483647, %v881
        %vm912 = vcmp.eq.f32.partialorder %v911, 8.507059e+37
        %v913 = vand.u32 %v881, 2147483648
        %v914 = vor.u32 1.1754944e-38, %v913
        %v915 = vsel %vm912, %v914, %v910
        %v916 = vrcp.pop %v884
        %v917 = vmul.f32 %v884, %v916
        %v918 = vsub.f32 1.0, %v917
        %v919 = vmul.f32 %v916, %v918
        %v920 = vadd.f32 %v916, %v919
        %vm921 = vweird.f32 %v884
        %vm922 = vweird.f32 %v916
        %vm923 = vmor %vm921, %vm922
        %v924 = vsel %vm923, %v916, %v920
        %v925 = vand.u32 2147483647, %v884
        %vm926 = vcmp.eq.f32.partialorder %v925, 8.507059e+37
        %v927 = vand.u32 %v884, 2147483648
        %v928 = vor.u32 1.1754944e-38, %v927
        %v929 = vsel %vm926, %v928, %v924
        %v930 = vrcp.pop %v887
        %v931 = vmul.f32 %v887, %v930
        %v932 = vsub.f32 1.0, %v931
        %v933 = vmul.f32 %v930, %v932
        %v934 = vadd.f32 %v930, %v933
        %vm935 = vweird.f32 %v887
        %vm936 = vweird.f32 %v930
        %vm937 = vmor %vm935, %vm936
        %v938 = vsel %vm937, %v930, %v934
        %v939 = vand.u32 2147483647, %v887
        %vm940 = vcmp.eq.f32.partialorder %v939, 8.507059e+37
        %v941 = vand.u32 %v887, 2147483648
        %v942 = vor.u32 1.1754944e-38, %v941
        %v943 = vsel %vm940, %v942, %v938
        %v944 = vmul.f32 %v869, %v901
        %v945 = vmul.f32 %v871, %v915
        %v946 = vmul.f32 %v873, %v929
        %v947 = vmul.f32 %v875, %v943
        %v949 = vsel %vm851, %v944, 0
        %951 = vmatpush.msra.mxu0 0.0
        %952 = vmatpush.msra.mxu0 0.0
        %953 = vmatpush.msra.mxu0 0.0
        %954 = vmatpush.msra.mxu0 0.0
        %955 = vmatpush.msra.mxu0 0.0
        %956 = vmatpush.msra.mxu0 0.0
        %957 = vmatpush.msra.mxu0 0.0
        %958 = vmatpush.msra.mxu0 0.0
        %959 = vmatpush.msra.mxu0 0.0
        %960 = vmatpush.msra.mxu0 0.0
        %961 = vmatpush.msra.mxu0 0.0
        %962 = vmatpush.msra.mxu0 0.0
        %963 = vmatpush.msra.mxu0 0.0
        %964 = vmatpush.msra.mxu0 0.0
        %965 = vmatpush.msra.mxu0 %v731
        %966 = vmatpush.msra.mxu0 %v730
        %967 = vmatmul.f32.gmra.mxu0 %v949
        %v968 = vpop.f32.mrf.mxu0
        %v969 = vadd.f32 0.0, %v968
        %970 = vdwg.mxu0
        %v972 = vsel %vm851, %v945, 0
        %974 = vmatpush.msra.mxu0 0.0
        %975 = vmatpush.msra.mxu0 0.0
        %976 = vmatpush.msra.mxu0 0.0
        %977 = vmatpush.msra.mxu0 0.0
        %978 = vmatpush.msra.mxu0 0.0
        %979 = vmatpush.msra.mxu0 0.0
        %980 = vmatpush.msra.mxu0 0.0
        %981 = vmatpush.msra.mxu0 0.0
        %982 = vmatpush.msra.mxu0 0.0
        %983 = vmatpush.msra.mxu0 0.0
        %984 = vmatpush.msra.mxu0 0.0
        %985 = vmatpush.msra.mxu0 0.0
        %986 = vmatpush.msra.mxu0 0.0
        %987 = vmatpush.msra.mxu0 0.0
        %988 = vmatpush.msra.mxu0 %v733
        %989 = vmatpush.msra.mxu0 %v732
        %990 = vmatmul.f32.gmra.mxu0 %v972
        %v991 = vpop.f32.mrf.mxu0
        %v992 = vadd.f32 0.0, %v991
        %993 = vdwg.mxu0
        %v995 = vsel %vm851, %v946, 0
        %997 = vmatpush.msra.mxu0 0.0
        %998 = vmatpush.msra.mxu0 0.0
        %999 = vmatpush.msra.mxu0 0.0
        %1000 = vmatpush.msra.mxu0 0.0
        %1001 = vmatpush.msra.mxu0 0.0
        %1002 = vmatpush.msra.mxu0 0.0
        %1003 = vmatpush.msra.mxu0 0.0
        %1004 = vmatpush.msra.mxu0 0.0
        %1005 = vmatpush.msra.mxu0 0.0
        %1006 = vmatpush.msra.mxu0 0.0
        %1007 = vmatpush.msra.mxu0 0.0
        %1008 = vmatpush.msra.mxu0 0.0
        %1009 = vmatpush.msra.mxu0 0.0
        %1010 = vmatpush.msra.mxu0 0.0
        %1011 = vmatpush.msra.mxu0 %v735
        %1012 = vmatpush.msra.mxu0 %v734
        %1013 = vmatmul.f32.gmra.mxu0 %v995
        %v1014 = vpop.f32.mrf.mxu0
        %v1015 = vadd.f32 0.0, %v1014
        %1016 = vdwg.mxu0
        %v1018 = vsel %vm851, %v947, 0
        %1020 = vmatpush.msra.mxu0 0.0
        %1021 = vmatpush.msra.mxu0 0.0
        %1022 = vmatpush.msra.mxu0 0.0
        %1023 = vmatpush.msra.mxu0 0.0
        %1024 = vmatpush.msra.mxu0 0.0
        %1025 = vmatpush.msra.mxu0 0.0
        %1026 = vmatpush.msra.mxu0 0.0
        %1027 = vmatpush.msra.mxu0 0.0
        %1028 = vmatpush.msra.mxu0 0.0
        %1029 = vmatpush.msra.mxu0 0.0
        %1030 = vmatpush.msra.mxu0 0.0
        %1031 = vmatpush.msra.mxu0 0.0
        %1032 = vmatpush.msra.mxu0 0.0
        %1033 = vmatpush.msra.mxu0 0.0
        %1034 = vmatpush.msra.mxu0 %v737
        %1035 = vmatpush.msra.mxu0 %v736
        %1036 = vmatmul.f32.gmra.mxu0 %v1018
        %v1037 = vpop.f32.mrf.mxu0
        %v1038 = vadd.f32 0.0, %v1037
        %1039 = vdwg.mxu0
        %1041 = vrot.lane.b32.xlu0 %v992, 8
        %v1042 = vpop.permute.xlu0 %1041
        %1045 = vrot.lane.b32.xlu0 %v1015, 16
        %v1046 = vpop.permute.xlu0 %1045
        %1049 = vrot.lane.b32.xlu0 %v1038, 24
        %v1050 = vpop.permute.xlu0 %1049
        %v1052 = vsel %vm738, %v969, %v1042
        %v1053 = vsel %vm851, %v1052, %v1046
        %vm1054 = vcmask 195584
        %v1055 = vsel %vm1054, %v1053, %v1050
        %v1056 = vld [vmem:[#allocation12] sm:$0xff]
        %v1057 = vld [vmem:[#allocation12 + $0x8] sm:$0xff]
        %v1058 = vld [vmem:[#allocation12 + $0x10] sm:$0xff]
        %v1059 = vld [vmem:[#allocation12 + $0x18] sm:$0xff]
        %v1060 = vld [vmem:[%s9] sm:$0x1]
        %v1062 = vperm.slane %v1060, 0
        %v1065 = vsel %vm676, %v1055, 0
        %1067 = vmatpush.msra.mxu0 0.0
        %1068 = vmatpush.msra.mxu0 0.0
        %1069 = vmatpush.msra.mxu0 0.0
        %1070 = vmatpush.msra.mxu0 0.0
        %1071 = vmatpush.msra.mxu0 0.0
        %1072 = vmatpush.msra.mxu0 0.0
        %1073 = vmatpush.msra.mxu0 0.0
        %1074 = vmatpush.msra.mxu0 0.0
        %1075 = vmatpush.msra.mxu0 0.0
        %1076 = vmatpush.msra.mxu0 0.0
        %1077 = vmatpush.msra.mxu0 0.0
        %1078 = vmatpush.msra.mxu0 0.0
        %1079 = vmatpush.msra.mxu0 %v1059
        %1080 = vmatpush.msra.mxu0 %v1058
        %1081 = vmatpush.msra.mxu0 %v1057
        %1082 = vmatpush.msra.mxu0 %v1056
        %1083 = vmatmul.f32.gmra.mxu0 %v1065
        %v1084 = vpop.f32.mrf.mxu0
        %v1085 = vadd.f32 %v1062, %v1084
        %1086 = vdwg.mxu0
        %1087 = vst.msk [vmem:[%s485] sm:$0xff] %vm676, %v1085
        %s1088 = sand.u32 %s275, 1
        %s1089 = scalar_lea.sflag [#allocation6], %s1088
        %s1090 = sand.u32 %s275, 1
        %s1091 = smul.addr %s1090, 8
        %s1092 = scalar_lea.vmem [#allocation13], %s1091
        // Predicated region
        $region85: #{tpu_custom_call.1} parent=59 // pred_check
          %p1093 = pneg %p285
        $region86: #{tpu_custom_call.1} parent=59 // pred_check_branch
          %1095 = sbr.rel (%p1093) target = $region88
        $region87: #{tpu_custom_call.1} parent=59 // pred_region
          %1097 = vsyncadd %s1089, 0
          %s1098 = smul.addr %s35, 2
          %s1099 = sadd.s32 %s36, %s1098
          %s1100 = smul.addr %s1099, 8
          %s1101 = scalar_lea.hbm %s10, %s1100
          %s1103 = sshll.u32 %s1092, 4
          %s1104 = int_to_ptr.vmem [resolvable:$true] %s1103
          %s1105 = sshll.u32 %s1101, 4
          %s1106 = int_to_ptr.hbm [resolvable:$true] %s1105
          %1108 = dma.vmem_to_hbm [thread:$0]  %s1104, 128, %s1106, %s1089
        $region88: #{tpu_custom_call.1} parent=59 // pred_fallthru
          _
      $region60: #{tpu_custom_call.1} parent=5 // pred_fallthru
        _
      %p1109 = scmp.le.s32.totalorder 2, %s26
      // Predicated region
      $region89: #{tpu_custom_call.1} parent=5 // pred_check
        %p1110 = pneg %p1109
      $region90: #{tpu_custom_call.1} parent=5 // pred_check_branch
        %1112 = sbr.rel (%p1110) target = $region92
      $region91: #{tpu_custom_call.1} parent=5 // pred_region
        %s1113 = ssub.s32 %s26, 2
        // Predicated region
        $region93: #{tpu_custom_call.1} parent=91 // pred_check
          %p1114 = pneg %p291
        $region94: #{tpu_custom_call.1} parent=91 // pred_check_branch
          %1116 = sbr.rel (%p1114) target = $region96
        $region95: #{tpu_custom_call.1} parent=91 // pred_region
          %s1117 = sand.u32 %s276, 1
          %s1118 = scalar_lea.sflag [#allocation6], %s1117
          %s1119 = sand.u32 %s276, 1
          %s1120 = smul.addr %s1119, 8
          %s1121 = scalar_lea.vmem [#allocation13], %s1120
          %1123 = dma.done %s1118, 128
        $region96: #{tpu_custom_call.1} parent=91 // pred_fallthru
          _
      $region92: #{tpu_custom_call.1} parent=5 // pred_fallthru
        _
    $region6: #{tpu_custom_call.1} parent=1 // loop_footer
      %s30 = sadd.s32 1, %s26
    $region7: #{tpu_custom_call.1} parent=1 // loop_footer_branch
      %25 = sbr.rel target = $region3
    $region8: #{tpu_custom_call.1} parent=1 // loop_exit
      _
    %1124 = vsyncpa [#allocation5], 1
    %s1125 = scalar_lea.sflag [#allocation5], 1
    %1126 = vsyncpa %s1125, 1
    %1127 = vsyncpa [#allocation8], 1
    %s1128 = scalar_lea.sflag [#allocation8], 1
    %1129 = vsyncpa %s1128, 1
    %1130 = vsyncpa [#allocation11], 1
    %1131 = vsyncpa [#allocation6], 1
    %s1132 = scalar_lea.sflag [#allocation6], 1
    %1133 = vsyncpa %s1132, 1

</llo_original>
